<compile_context>
chip_gen: v7x
topology: tpu7x:2x2x1
jax: 0.10.0
libtpu: 0.0.40
codegen_flags: <defaults>
</compile_context>

<pallas_src>
import jax
import jax.numpy as jnp
from jax.experimental import pallas as pl
from jax.experimental.pallas import tpu as pltpu

LN_EPS = 1e-5


def _round_up(x, m):
    return (x + m - 1) // m * m


def _vmem_capacity_bytes():
    """Physical VMEM per TensorCore; conservative 64 MiB (v7x) fallback."""
    try:
        info = pltpu.get_tpu_info()
        cap = getattr(info, "vmem_capacity_bytes", None)
        if cap:
            return int(cap)
    except Exception:
        pass
    return 64 * 1024 * 1024


def _make_kernel(num_blocks, k_chunk, resident):
    """Build the staged kernel.

    Grid: (batch_tile, stage) with stage in [0, num_blocks + 1]:
      stage 0              -> input projection  (writes h_ref)
      stage 1..num_blocks  -> residual block (stage-1) (updates h_ref in place)
      stage num_blocks + 1 -> output projection (writes o_ref)

    In "resident" mode the per-block weight refs hold the full stacked tensors
    (indexed dynamically by stage); in "stream" mode they hold one block
    (leading dim 1, pipelined by the BlockSpec index map).
    """

    def kernel(x_ref, w_in_ref, b_in_ref,
               ln_g_ref, ln_b_ref, w1_ref, b1_ref, w2_ref, b2_ref,
               w_out_ref, b_out_ref,
               o_ref, h_ref):
        s = pl.program_id(1)
        two_h = w1_ref.shape[-1]

        @pl.when(s == 0)
        def _input_proj():
            x = x_ref[...].astype(w_in_ref.dtype)
            h_ref[...] = (jnp.dot(x, w_in_ref[...],
                                  preferred_element_type=jnp.float32)
                          + b_in_ref[...].astype(jnp.float32))

        @pl.when(jnp.logical_and(s > 0, s <= num_blocks))
        def _residual_block():
            blk = jnp.clip(s - 1, 0, num_blocks - 1) if resident else 0
            h = h_ref[...]                                   # (tb, H) f32
            gamma = ln_g_ref[blk].astype(jnp.float32)        # (1, H)
            beta = ln_b_ref[blk].astype(jnp.float32)
            # Single-pass LayerNorm statistics (biased var, matches nn.LayerNorm).
            mu = jnp.mean(h, axis=-1, keepdims=True)
            m2 = jnp.mean(h * h, axis=-1, keepdims=True)
            var = m2 - mu * mu
            hn = (h - mu) * jax.lax.rsqrt(var + LN_EPS) * gamma + beta
            hn_w = hn.astype(w1_ref.dtype)                   # MXU feed dtype
            b1 = b1_ref[blk].astype(jnp.float32)             # (1, 2H)
            acc = h + b2_ref[blk].astype(jnp.float32)        # residual + linear2 bias
            # K-block the expansion so the (tb, 2H) intermediate never
            # materializes: acc += relu(hn @ w1[:, k] + b1[k]) @ w2[k].
            for k0 in range(0, two_h, k_chunk):
                kc = min(k_chunk, two_h - k0)
                w1_k = w1_ref[blk, :, k0:k0 + kc]            # (H, kc)
                a = jnp.dot(hn_w, w1_k, preferred_element_type=jnp.float32)
                a = jnp.maximum(a + b1[:, k0:k0 + kc], 0.0)  # ReLU
                # dropout: identity (eval mode)
                w2_k = w2_ref[blk, k0:k0 + kc, :]            # (kc, H)
                acc = acc + jnp.dot(a.astype(w2_k.dtype), w2_k,
                                    preferred_element_type=jnp.float32)
            h_ref[...] = acc

        @pl.when(s == num_blocks + 1)
        def _output_proj():
            h = h_ref[...].astype(w_out_ref.dtype)
            out = (jnp.dot(h, w_out_ref[...],
                           preferred_element_type=jnp.float32)
                   + b_out_ref[...].astype(jnp.float32))
            o_ref[...] = out.astype(o_ref.dtype)

    return kernel


def residual_mlp(x, params, *, tile_b=512, k_chunk=512,
                 weight_dtype=jnp.bfloat16, mode="auto"):
    """x: [B, input_dim].  params: dict of stacked f32 (or any) weights.

    All parameters are cast to `weight_dtype` (bf16 by default) before the
    kernel; accumulation stays f32.  `mode` in {"auto", "resident", "stream"}.
    """
    assert mode in ("auto", "resident", "stream")
    B, input_dim = x.shape
    hidden_dim = params["w_in"].shape[1]
    output_dim = params["w_out"].shape[1]
    num_blocks = params["w1"].shape[0]
    assert num_blocks >= 1

    # bf16 weights are the actual default path (not just a suggestion).
    p = {k: v.astype(weight_dtype) for k, v in params.items()}

    # ---- adaptive batch tiling (8-aligned, near-even tiles, low waste) ------
    num_tiles = max(1, pl.cdiv(_round_up(B, 8), tile_b))
    if num_tiles == 1 and _round_up(B, 8) >= 512:
        num_tiles = 2          # keep both v7x TensorCores busy for large batches
    tb = _round_up(pl.cdiv(B, num_tiles), 8)
    b_pad = num_tiles * tb

    # Lane-dense output: pad the output feature dim up to a multiple of 128.
    out_pad = _round_up(output_dim, 128)

    xp = x if b_pad == B else jnp.pad(x, ((0, b_pad - B), (0, 0)))
    w_out, b_out = p["w_out"], p["b_out"]
    if out_pad != output_dim:
        w_out = jnp.pad(w_out, ((0, 0), (0, out_pad - output_dim)))
        b_out = jnp.pad(b_out, ((0, 0), (0, out_pad - output_dim)))

    # ---- VMEM budget & residency-mode selection (generation aware) ---------
    wsize = jnp.dtype(weight_dtype).itemsize
    xsize = x.dtype.itemsize
    per_block = (4 * hidden_dim * hidden_dim + 5 * hidden_dim) * wsize
    fixed = ((input_dim * hidden_dim + hidden_dim
              + hidden_dim * out_pad + out_pad) * wsize        # resident proj weights
             + 2 * tb * input_dim * xsize                      # x tile (double-buffered)
             + 2 * tb * out_pad * xsize                        # out tile (double-buffered)
             + tb * hidden_dim * 4                             # h scratch (f32)
             + 4 * tb * hidden_dim * 4                         # hn/acc/etc temporaries
             + tb * min(k_chunk, 2 * hidden_dim) * 4           # per-chunk activation
             + (4 << 20))                                      # slack for Mosaic internals

    vmem_cap = _vmem_capacity_bytes()
    budget = vmem_cap - max(vmem_cap // 8, 8 << 20)            # leave headroom

    if mode == "auto":
        mode = "resident" if fixed + num_blocks * per_block <= budget else "stream"
    resident = (mode == "resident")

    vmem_full = pl.BlockSpec(memory_space=pltpu.MemorySpace.VMEM)

    if resident:
        # Whole stacked block weights live in VMEM for the entire call: no
        # re-streaming per batch tile (the big win on v5e/v6e; fits v7x in bf16).
        block_specs = [vmem_full] * 6      # ln_g, ln_b, w1, b1, w2, b2
    else:
        # Stream one block's weights per stage; clamp(s-1) means stage 0
        # prefetches block 0 and the last stage reuses block NB-1 (no extra DMA).
        def blk(s):
            return jnp.clip(s - 1, 0, num_blocks - 1)
        block_specs = [
            pl.BlockSpec((1, 1, hidden_dim), lambda b, s: (blk(s), 0, 0)),               # ln_g
            pl.BlockSpec((1, 1, hidden_dim), lambda b, s: (blk(s), 0, 0)),               # ln_b
            pl.BlockSpec((1, hidden_dim, 2 * hidden_dim), lambda b, s: (blk(s), 0, 0)),  # w1
            pl.BlockSpec((1, 1, 2 * hidden_dim), lambda b, s: (blk(s), 0, 0)),           # b1
            pl.BlockSpec((1, 2 * hidden_dim, hidden_dim), lambda b, s: (blk(s), 0, 0)),  # w2
            pl.BlockSpec((1, 1, hidden_dim), lambda b, s: (blk(s), 0, 0)),               # b2
        ]

    grid = (num_tiles, num_blocks + 2)
    kernel = _make_kernel(num_blocks, k_chunk, resident)

    out = pl.pallas_call(
        kernel,
        out_shape=jax.ShapeDtypeStruct((b_pad, out_pad), x.dtype),
        grid_spec=pltpu.PrefetchScalarGridSpec(
            num_scalar_prefetch=0,
            grid=grid,
            in_specs=[
                pl.BlockSpec((tb, input_dim), lambda b, s: (b, 0)),   # x
                vmem_full,                                            # w_in
                vmem_full,                                            # b_in
                *block_specs,                                         # ln_g, ln_b, w1, b1, w2, b2
                vmem_full,                                            # w_out
                vmem_full,                                            # b_out
            ],
            out_specs=pl.BlockSpec((tb, out_pad), lambda b, s: (b, 0)),
            scratch_shapes=[pltpu.VMEM((tb, hidden_dim), jnp.float32)],  # h carry
        ),
        compiler_params=pltpu.CompilerParams(
            dimension_semantics=("parallel", "arbitrary"),
            vmem_limit_bytes=int(budget),
        ),
    )(xp, p["w_in"], p["b_in"],
      p["ln_g"], p["ln_b"], p["w1"], p["b1"], p["w2"], p["b2"],
      w_out, b_out)

    return out[:B, :output_dim]


def init_params(key, input_dim, hidden_dim, output_dim, num_blocks,
                dtype=jnp.float32):
    """Deterministic synthetic parameter init (shapes match the PyTorch module)."""
    ks = jax.random.split(key, 8)
    scale = 0.02
    p = {
        "w_in":  scale * jax.random.normal(ks[0], (input_dim, hidden_dim), jnp.float32),
        "b_in":  scale * jax.random.normal(ks[1], (1, hidden_dim), jnp.float32),
        "ln_g":  jnp.ones((num_blocks, 1, hidden_dim), jnp.float32),
        "ln_b":  jnp.zeros((num_blocks, 1, hidden_dim), jnp.float32),
        "w1":    scale * jax.random.normal(ks[2], (num_blocks, hidden_dim, 2 * hidden_dim), jnp.float32),
        "b1":    scale * jax.random.normal(ks[3], (num_blocks, 1, 2 * hidden_dim), jnp.float32),
        "w2":    scale * jax.random.normal(ks[4], (num_blocks, 2 * hidden_dim, hidden_dim), jnp.float32),
        "b2":    scale * jax.random.normal(ks[5], (num_blocks, 1, hidden_dim), jnp.float32),
        "w_out": scale * jax.random.normal(ks[6], (hidden_dim, output_dim), jnp.float32),
        "b_out": scale * jax.random.normal(ks[7], (1, output_dim), jnp.float32),
    }
    return {k: v.astype(dtype) for k, v in p.items()}


def residual_mlp_ref(x, params):
    """Pure-JAX f32 reference matching the PyTorch forward (eval mode)."""
    f32 = lambda a: a.astype(jnp.float32)

    def layer_norm(h, g, b):
        mu = jnp.mean(h, axis=-1, keepdims=True)
        var = jnp.mean((h - mu) ** 2, axis=-1, keepdims=True)
        return (h - mu) * jax.lax.rsqrt(var + LN_EPS) * g + b

    h = x @ f32(params["w_in"]) + f32(params["b_in"])
    nb = params["w1"].shape[0]
    for i in range(nb):
        residual = h
        hn = layer_norm(h, f32(params["ln_g"][i]), f32(params["ln_b"][i]))
        a = jnp.maximum(hn @ f32(params["w1"][i]) + f32(params["b1"][i]), 0.0)
        h = residual + a @ f32(params["w2"][i]) + f32(params["b2"][i])
    return h @ f32(params["w_out"]) + f32(params["b_out"])


if __name__ == "__main__":
    # Small shapes consistent with the module's forward (scaled down from
    # input_dim=1024, hidden_dim=768, num_blocks=6; output_dim kept at 100 to
    # exercise the lane-padding path).
    B, INPUT_DIM, HIDDEN_DIM, OUTPUT_DIM, NUM_BLOCKS = 64, 256, 128, 100, 3

    key = jax.random.PRNGKey(0)
    kx, kp = jax.random.split(key)
    x = jax.random.normal(kx, (B, INPUT_DIM), jnp.float32)
    params = init_params(kp, INPUT_DIM, HIDDEN_DIM, OUTPUT_DIM, NUM_BLOCKS)

    ref = residual_mlp_ref(x, params)

    # 1) f32 weights (tight tolerance) — exercises the auto/resident path.
    out_f32 = jax.block_until_ready(
        residual_mlp(x, params, weight_dtype=jnp.float32))
    assert out_f32.shape == (B, OUTPUT_DIM)
    assert jnp.allclose(out_f32, ref, atol=1e-3, rtol=1e-3), "f32 mismatch vs reference"

    # 2) default bf16 weights, resident mode (bf16-appropriate tolerance).
    out_res = jax.block_until_ready(residual_mlp(x, params, mode="resident"))
    assert out_res.shape == (B, OUTPUT_DIM)
    assert jnp.allclose(out_res, ref, atol=5e-2, rtol=5e-2), "bf16 resident mismatch"

    # 3) bf16 weights, streaming mode (large-model fallback path).
    out_str = jax.block_until_ready(residual_mlp(x, params, mode="stream"))
    assert jnp.allclose(out_str, ref, atol=5e-2, rtol=5e-2), "bf16 streaming mismatch"
    assert jnp.allclose(out_res, out_str, atol=1e-4, rtol=1e-4), "mode mismatch"

    print("KERNEL_OK")
</pallas_src>

<mosaic_0001>
module attributes {stable_mosaic.version = 11 : i64} {
  func.func @kernel(%arg0: i32, %arg1: i32, %arg2: memref<64x256xf32, #tpu.memory_space<vmem>>, %arg3: memref<256x128xf32, #tpu.memory_space<vmem>>, %arg4: memref<1x128xf32, #tpu.memory_space<vmem>>, %arg5: memref<3x1x128xf32, #tpu.memory_space<vmem>>, %arg6: memref<3x1x128xf32, #tpu.memory_space<vmem>>, %arg7: memref<3x128x256xf32, #tpu.memory_space<vmem>>, %arg8: memref<3x1x256xf32, #tpu.memory_space<vmem>>, %arg9: memref<3x256x128xf32, #tpu.memory_space<vmem>>, %arg10: memref<3x1x128xf32, #tpu.memory_space<vmem>>, %arg11: memref<128x128xf32, #tpu.memory_space<vmem>>, %arg12: memref<1x128xf32, #tpu.memory_space<vmem>>, %arg13: memref<64x128xf32, #tpu.memory_space<vmem>>, %arg14: memref<64x128xf32, #tpu.memory_space<vmem>>) attributes {dimension_semantics = [#tpu.dimension_semantics<parallel>, #tpu.dimension_semantics<arbitrary>], iteration_bounds = array<i64: 1, 5>, scalar_prefetch = 0 : i64, scratch_operands = 1 : i64, tpu.core_type = #tpu.core_type<tc>, window_params = [{transform_indices = @transform_0, window_bounds = array<i64: 64, 256>}, {pipeline_mode = #tpu.pipeline_mode<synchronous>, transform_indices = @transform_1, window_bounds = array<i64: 256, 128>}, {pipeline_mode = #tpu.pipeline_mode<synchronous>, transform_indices = @transform_2, window_bounds = array<i64: 1, 128>}, {pipeline_mode = #tpu.pipeline_mode<synchronous>, transform_indices = @transform_3, window_bounds = array<i64: 3, 1, 128>}, {pipeline_mode = #tpu.pipeline_mode<synchronous>, transform_indices = @transform_4, window_bounds = array<i64: 3, 1, 128>}, {pipeline_mode = #tpu.pipeline_mode<synchronous>, transform_indices = @transform_5, window_bounds = array<i64: 3, 128, 256>}, {pipeline_mode = #tpu.pipeline_mode<synchronous>, transform_indices = @transform_6, window_bounds = array<i64: 3, 1, 256>}, {pipeline_mode = #tpu.pipeline_mode<synchronous>, transform_indices = @transform_7, window_bounds = array<i64: 3, 256, 128>}, {pipeline_mode = #tpu.pipeline_mode<synchronous>, transform_indices = @transform_8, window_bounds = array<i64: 3, 1, 128>}, {pipeline_mode = #tpu.pipeline_mode<synchronous>, transform_indices = @transform_9, window_bounds = array<i64: 128, 128>}, {pipeline_mode = #tpu.pipeline_mode<synchronous>, transform_indices = @transform_10, window_bounds = array<i64: 1, 128>}, {transform_indices = @transform_11, window_bounds = array<i64: 64, 128>}]} {
    %c0_i32 = arith.constant 0 : i32
    %0 = arith.cmpi eq, %arg1, %c0_i32 : i32
    %1 = arith.extui %0 : i1 to i32
    %c0_i32_0 = arith.constant 0 : i32
    %2 = arith.cmpi ne, %1, %c0_i32_0 : i32
    scf.if %2 {
      %c0 = arith.constant 0 : index
      %c0_4 = arith.constant 0 : index
      %11 = vector.load %arg2[%c0, %c0_4] : memref<64x256xf32, #tpu.memory_space<vmem>>, vector<64x256xf32>
      %c0_5 = arith.constant 0 : index
      %c0_6 = arith.constant 0 : index
      %12 = vector.load %arg3[%c0_5, %c0_6] : memref<256x128xf32, #tpu.memory_space<vmem>>, vector<256x128xf32>
      %cst = arith.constant dense<0.000000e+00> : vector<64x128xf32>
      %13 = tpu.matmul %11, %12, %cst {dimension_numbers = #tpu.dot_dimension_numbers<[1], [0], [0], [1], [0, 0, 1, 1], [], []>} : vector<64x256xf32>, vector<256x128xf32>, vector<64x128xf32> -> vector<64x128xf32>
      %c0_7 = arith.constant 0 : index
      %c0_8 = arith.constant 0 : index
      %14 = vector.load %arg4[%c0_7, %c0_8] : memref<1x128xf32, #tpu.memory_space<vmem>>, vector<1x128xf32>
      %15 = vector.broadcast %14 : vector<1x128xf32> to vector<64x128xf32>
      %16 = arith.addf %13, %15 : vector<64x128xf32>
      %c0_9 = arith.constant 0 : index
      %c0_10 = arith.constant 0 : index
      %17 = vector.load %arg14[%c0_9, %c0_10] : memref<64x128xf32, #tpu.memory_space<vmem>>, vector<64x128xf32>
      tpu.vector_store %arg14[%c0_9, %c0_10], %16 {strides = array<i32>} : memref<64x128xf32, #tpu.memory_space<vmem>>, vector<64x128xf32>,
    } else {
    }
    %c0_i32_1 = arith.constant 0 : i32
    %3 = arith.cmpi sgt, %arg1, %c0_i32_1 : i32
    %c3_i32 = arith.constant 3 : i32
    %4 = arith.cmpi sle, %arg1, %c3_i32 : i32
    %5 = arith.andi %3, %4 : i1
    %6 = arith.extui %5 : i1 to i32
    %c0_i32_2 = arith.constant 0 : i32
    %7 = arith.cmpi ne, %6, %c0_i32_2 : i32
    scf.if %7 {
      %c1_i32 = arith.constant 1 : i32
      %11 = arith.subi %arg1, %c1_i32 : i32
      %c0_i32_4 = arith.constant 0 : i32
      %c2_i32 = arith.constant 2 : i32
      %12 = arith.maxsi %c0_i32_4, %11 : i32
      %13 = arith.minsi %c2_i32, %12 : i32
      %c0 = arith.constant 0 : index
      %c0_5 = arith.constant 0 : index
      %14 = vector.load %arg14[%c0, %c0_5] : memref<64x128xf32, #tpu.memory_space<vmem>>, vector<64x128xf32>
      %15 = arith.index_cast %13 : i32 to index
      %c0_6 = arith.constant 0 : index
      %c0_7 = arith.constant 0 : index
      %16 = vector.load %arg5[%15, %c0_6, %c0_7] : memref<3x1x128xf32, #tpu.memory_space<vmem>>, vector<1x1x128xf32>
      %17 = vector.shape_cast %16 : vector<1x1x128xf32> to vector<1x128xf32>
      %18 = arith.index_cast %13 : i32 to index
      %c0_8 = arith.constant 0 : index
      %c0_9 = arith.constant 0 : index
      %19 = vector.load %arg6[%18, %c0_8, %c0_9] : memref<3x1x128xf32, #tpu.memory_space<vmem>>, vector<1x1x128xf32>
      %20 = vector.shape_cast %19 : vector<1x1x128xf32> to vector<1x128xf32>
      %cst = arith.constant dense<0.000000e+00> : vector<64xf32>
      %21 = vector.multi_reduction <add>, %14, %cst [1] : vector<64x128xf32> to vector<64xf32>
      %22 = vector.shape_cast %21 : vector<64xf32> to vector<64x1xf32>
      %cst_10 = arith.constant 1.280000e+02 : f32
      %23 = vector.broadcast %cst_10 : f32 to vector<64x1xf32>
      %24 = arith.divf %22, %23 : vector<64x1xf32>
      %25 = arith.mulf %14, %14 : vector<64x128xf32>
      %cst_11 = arith.constant dense<0.000000e+00> : vector<64xf32>
      %26 = vector.multi_reduction <add>, %25, %cst_11 [1] : vector<64x128xf32> to vector<64xf32>
      %27 = vector.shape_cast %26 : vector<64xf32> to vector<64x1xf32>
      %cst_12 = arith.constant 1.280000e+02 : f32
      %28 = vector.broadcast %cst_12 : f32 to vector<64x1xf32>
      %29 = arith.divf %27, %28 : vector<64x1xf32>
      %30 = arith.mulf %24, %24 : vector<64x1xf32>
      %31 = arith.subf %29, %30 : vector<64x1xf32>
      %32 = vector.broadcast %24 : vector<64x1xf32> to vector<64x128xf32>
      %33 = arith.subf %14, %32 : vector<64x128xf32>
      %cst_13 = arith.constant 9.99999974E-6 : f32
      %34 = vector.broadcast %cst_13 : f32 to vector<64x1xf32>
      %35 = arith.addf %31, %34 : vector<64x1xf32>
      %36 = math.rsqrt %35 : vector<64x1xf32>
      %37 = vector.broadcast %36 : vector<64x1xf32> to vector<64x128xf32>
      %38 = arith.mulf %33, %37 : vector<64x128xf32>
      %39 = vector.broadcast %17 : vector<1x128xf32> to vector<64x128xf32>
      %40 = arith.mulf %38, %39 : vector<64x128xf32>
      %41 = vector.broadcast %20 : vector<1x128xf32> to vector<64x128xf32>
      %42 = arith.addf %40, %41 : vector<64x128xf32>
      %43 = arith.index_cast %13 : i32 to index
      %c0_14 = arith.constant 0 : index
      %c0_15 = arith.constant 0 : index
      %44 = vector.load %arg8[%43, %c0_14, %c0_15] : memref<3x1x256xf32, #tpu.memory_space<vmem>>, vector<1x1x256xf32>
      %45 = vector.shape_cast %44 : vector<1x1x256xf32> to vector<1x256xf32>
      %46 = arith.index_cast %13 : i32 to index
      %c0_16 = arith.constant 0 : index
      %c0_17 = arith.constant 0 : index
      %47 = vector.load %arg10[%46, %c0_16, %c0_17] : memref<3x1x128xf32, #tpu.memory_space<vmem>>, vector<1x1x128xf32>
      %48 = vector.shape_cast %47 : vector<1x1x128xf32> to vector<1x128xf32>
      %49 = vector.broadcast %48 : vector<1x128xf32> to vector<64x128xf32>
      %50 = arith.addf %14, %49 : vector<64x128xf32>
      %51 = arith.index_cast %13 : i32 to index
      %c0_18 = arith.constant 0 : index
      %c0_19 = arith.constant 0 : index
      %52 = vector.load %arg7[%51, %c0_18, %c0_19] : memref<3x128x256xf32, #tpu.memory_space<vmem>>, vector<1x128x256xf32>
      %53 = vector.shape_cast %52 : vector<1x128x256xf32> to vector<128x256xf32>
      %cst_20 = arith.constant dense<0.000000e+00> : vector<64x256xf32>
      %54 = tpu.matmul %42, %53, %cst_20 {dimension_numbers = #tpu.dot_dimension_numbers<[1], [0], [0], [1], [0, 0, 1, 1], [], []>} : vector<64x128xf32>, vector<128x256xf32>, vector<64x256xf32> -> vector<64x256xf32>
      %55 = vector.broadcast %45 : vector<1x256xf32> to vector<64x256xf32>
      %56 = arith.addf %54, %55 : vector<64x256xf32>
      %cst_21 = arith.constant 0.000000e+00 : f32
      %57 = vector.broadcast %cst_21 : f32 to vector<64x256xf32>
      %58 = arith.maximumf %56, %57 : vector<64x256xf32>
      %59 = arith.index_cast %13 : i32 to index
      %c0_22 = arith.constant 0 : index
      %c0_23 = arith.constant 0 : index
      %60 = vector.load %arg9[%59, %c0_22, %c0_23] : memref<3x256x128xf32, #tpu.memory_space<vmem>>, vector<1x256x128xf32>
      %61 = vector.shape_cast %60 : vector<1x256x128xf32> to vector<256x128xf32>
      %cst_24 = arith.constant dense<0.000000e+00> : vector<64x128xf32>
      %62 = tpu.matmul %58, %61, %cst_24 {dimension_numbers = #tpu.dot_dimension_numbers<[1], [0], [0], [1], [0, 0, 1, 1], [], []>} : vector<64x256xf32>, vector<256x128xf32>, vector<64x128xf32> -> vector<64x128xf32>
      %63 = arith.addf %50, %62 : vector<64x128xf32>
      %c0_25 = arith.constant 0 : index
      %c0_26 = arith.constant 0 : index
      %64 = vector.load %arg14[%c0_25, %c0_26] : memref<64x128xf32, #tpu.memory_space<vmem>>, vector<64x128xf32>
      tpu.vector_store %arg14[%c0_25, %c0_26], %63 {strides = array<i32>} : memref<64x128xf32, #tpu.memory_space<vmem>>, vector<64x128xf32>,
    } else {
    }
    %c4_i32 = arith.constant 4 : i32
    %8 = arith.cmpi eq, %arg1, %c4_i32 : i32
    %9 = arith.extui %8 : i1 to i32
    %c0_i32_3 = arith.constant 0 : i32
    %10 = arith.cmpi ne, %9, %c0_i32_3 : i32
    scf.if %10 {
      %c0 = arith.constant 0 : index
      %c0_4 = arith.constant 0 : index
      %11 = vector.load %arg14[%c0, %c0_4] : memref<64x128xf32, #tpu.memory_space<vmem>>, vector<64x128xf32>
      %c0_5 = arith.constant 0 : index
      %c0_6 = arith.constant 0 : index
      %12 = vector.load %arg11[%c0_5, %c0_6] : memref<128x128xf32, #tpu.memory_space<vmem>>, vector<128x128xf32>
      %cst = arith.constant dense<0.000000e+00> : vector<64x128xf32>
      %13 = tpu.matmul %11, %12, %cst {dimension_numbers = #tpu.dot_dimension_numbers<[1], [0], [0], [1], [0, 0, 1, 1], [], []>} : vector<64x128xf32>, vector<128x128xf32>, vector<64x128xf32> -> vector<64x128xf32>
      %c0_7 = arith.constant 0 : index
      %c0_8 = arith.constant 0 : index
      %14 = vector.load %arg12[%c0_7, %c0_8] : memref<1x128xf32, #tpu.memory_space<vmem>>, vector<1x128xf32>
      %15 = vector.broadcast %14 : vector<1x128xf32> to vector<64x128xf32>
      %16 = arith.addf %13, %15 : vector<64x128xf32>
      %c0_9 = arith.constant 0 : index
      %c0_10 = arith.constant 0 : index
      %17 = vector.load %arg13[%c0_9, %c0_10] : memref<64x128xf32, #tpu.memory_space<vmem>>, vector<64x128xf32>
      tpu.vector_store %arg13[%c0_9, %c0_10], %16 {strides = array<i32>} : memref<64x128xf32, #tpu.memory_space<vmem>>, vector<64x128xf32>,
    } else {
    }
    return
  }
  func.func @transform_0(%arg0: i32, %arg1: i32) -> (i32, i32) {
    %c0_i32 = arith.constant 0 : i32
    %c0_i32_0 = arith.constant 0 : i32
    return %arg0, %c0_i32 : i32, i32
  }
  func.func @transform_1(%arg0: i32, %arg1: i32) -> (i32, i32) {
    %c0_i32 = arith.constant 0 : i32
    %c0_i32_0 = arith.constant 0 : i32
    %c0_i32_1 = arith.constant 0 : i32
    return %c0_i32, %c0_i32_0 : i32, i32
  }
  func.func @transform_2(%arg0: i32, %arg1: i32) -> (i32, i32) {
    %c0_i32 = arith.constant 0 : i32
    %c0_i32_0 = arith.constant 0 : i32
    %c0_i32_1 = arith.constant 0 : i32
    return %c0_i32, %c0_i32_0 : i32, i32
  }
  func.func @transform_3(%arg0: i32, %arg1: i32) -> (i32, i32, i32) {
    %c0_i32 = arith.constant 0 : i32
    %c0_i32_0 = arith.constant 0 : i32
    %c0_i32_1 = arith.constant 0 : i32
    %c0_i32_2 = arith.constant 0 : i32
    return %c0_i32, %c0_i32_0, %c0_i32_1 : i32, i32, i32
  }
  func.func @transform_4(%arg0: i32, %arg1: i32) -> (i32, i32, i32) {
    %c0_i32 = arith.constant 0 : i32
    %c0_i32_0 = arith.constant 0 : i32
    %c0_i32_1 = arith.constant 0 : i32
    %c0_i32_2 = arith.constant 0 : i32
    return %c0_i32, %c0_i32_0, %c0_i32_1 : i32, i32, i32
  }
  func.func @transform_5(%arg0: i32, %arg1: i32) -> (i32, i32, i32) {
    %c0_i32 = arith.constant 0 : i32
    %c0_i32_0 = arith.constant 0 : i32
    %c0_i32_1 = arith.constant 0 : i32
    %c0_i32_2 = arith.constant 0 : i32
    return %c0_i32, %c0_i32_0, %c0_i32_1 : i32, i32, i32
  }
  func.func @transform_6(%arg0: i32, %arg1: i32) -> (i32, i32, i32) {
    %c0_i32 = arith.constant 0 : i32
    %c0_i32_0 = arith.constant 0 : i32
    %c0_i32_1 = arith.constant 0 : i32
    %c0_i32_2 = arith.constant 0 : i32
    return %c0_i32, %c0_i32_0, %c0_i32_1 : i32, i32, i32
  }
  func.func @transform_7(%arg0: i32, %arg1: i32) -> (i32, i32, i32) {
    %c0_i32 = arith.constant 0 : i32
    %c0_i32_0 = arith.constant 0 : i32
    %c0_i32_1 = arith.constant 0 : i32
    %c0_i32_2 = arith.constant 0 : i32
    return %c0_i32, %c0_i32_0, %c0_i32_1 : i32, i32, i32
  }
  func.func @transform_8(%arg0: i32, %arg1: i32) -> (i32, i32, i32) {
    %c0_i32 = arith.constant 0 : i32
    %c0_i32_0 = arith.constant 0 : i32
    %c0_i32_1 = arith.constant 0 : i32
    %c0_i32_2 = arith.constant 0 : i32
    return %c0_i32, %c0_i32_0, %c0_i32_1 : i32, i32, i32
  }
  func.func @transform_9(%arg0: i32, %arg1: i32) -> (i32, i32) {
    %c0_i32 = arith.constant 0 : i32
    %c0_i32_0 = arith.constant 0 : i32
    %c0_i32_1 = arith.constant 0 : i32
    return %c0_i32, %c0_i32_0 : i32, i32
  }
  func.func @transform_10(%arg0: i32, %arg1: i32) -> (i32, i32) {
    %c0_i32 = arith.constant 0 : i32
    %c0_i32_0 = arith.constant 0 : i32
    %c0_i32_1 = arith.constant 0 : i32
    return %c0_i32, %c0_i32_0 : i32, i32
  }
  func.func @transform_11(%arg0: i32, %arg1: i32) -> (i32, i32) {
    %c0_i32 = arith.constant 0 : i32
    %c0_i32_0 = arith.constant 0 : i32
    return %arg0, %c0_i32 : i32, i32
  }
}

</mosaic_0001>

<llo_original>
// kernel: tpu_custom_call.1
$region0: #{tpu_custom_call.1}
  #allocation0 [shape = 'u32[]', space=smem, size = 0x4, offset = 0x4, fixed_abs, tag = 'smem constant byte address 0x4 - core index']
  #allocation1 [shape = 'u32[144,128]{1,0:T(1,128)}', space=vmem, size = 0x12000, scoped, tag = 'internal scratch']
  #allocation2 [shape = 'f32[64,128]{1,0:T(8,128)}', space=vmem, size = 0x8000, scoped, tag = 'scratch operand']
  %s0 = inlined_call_operand.hbm [shape: f32[64,256], index: 0, kind: input, shape index: {}]
  %s1 = inlined_call_operand.hbm [shape: f32[256,128], index: 1, kind: input, shape index: {}]
  %s2 = inlined_call_operand.hbm [shape: f32[1,128], index: 2, kind: input, shape index: {}]
  %s3 = inlined_call_operand.vmem [shape: f32[3,1,128], index: 3, kind: input, shape index: {}]
  %s4 = inlined_call_operand.vmem [shape: f32[3,1,128], index: 4, kind: input, shape index: {}]
  %s5 = inlined_call_operand.hbm [shape: f32[3,128,256], index: 5, kind: input, shape index: {}]
  %s6 = inlined_call_operand.vmem [shape: f32[3,1,256], index: 6, kind: input, shape index: {}]
  %s7 = inlined_call_operand.hbm [shape: f32[3,256,128], index: 7, kind: input, shape index: {}]
  %s8 = inlined_call_operand.vmem [shape: f32[3,1,128], index: 8, kind: input, shape index: {}]
  %s9 = inlined_call_operand.hbm [shape: f32[128,128], index: 9, kind: input, shape index: {}]
  %s10 = inlined_call_operand.vmem [shape: f32[1,128], index: 10, kind: input, shape index: {}]
  %s11 = inlined_call_operand.hbm [shape: f32[64,128], index: 11, kind: output, shape index: {}]
  %s12 = sld [smem:[#allocation0]]
  $region113: #{tpu_custom_call.1} parent=0
    _
  %s14 = ssub.s32 1, %s12
  %s15 = scalar_select 0, %s14, %s12
  $region1: #{tpu_custom_call.1} parent=0
    #allocation3 [shape = 'u8[65536]{0}', space=vmem, size = 0x10000, scoped, tag = 'input window, operand 0, single buffered']
    #allocation4 [shape = 's32[2]{0}', space=sflag, size = 0x8, scoped, tag = 'scoped memory for tpu_custom_call.1']
    #allocation5 [shape = 's32[2]{0}', space=sflag, size = 0x8, scoped, tag = 'scoped memory for tpu_custom_call.1']
    #allocation6 [shape = 'u8[131072]{0}', space=vmem, size = 0x20000, scoped, tag = 'input window, operand 1, single buffered']
    #allocation7 [shape = 's32[1]{0}', space=sflag, size = 0x4, scoped, tag = 'scoped memory for tpu_custom_call.1']
    #allocation8 [shape = 'u8[512]{0}', space=vmem, size = 0x400, scoped, tag = 'input window, operand 2, single buffered']
    #allocation9 [shape = 'u8[393216]{0}', space=vmem, size = 0x60000, scoped, tag = 'input window, operand 5, single buffered']
    #allocation10 [shape = 's32[1]{0}', space=sflag, size = 0x4, scoped, tag = 'scoped memory for tpu_custom_call.1']
    #allocation11 [shape = 'u8[393216]{0}', space=vmem, size = 0x60000, scoped, tag = 'input window, operand 7, single buffered']
    #allocation12 [shape = 'u8[65536]{0}', space=vmem, size = 0x10000, scoped, tag = 'input window, operand 9, single buffered']
    #allocation13 [shape = 's32[1]{0}', space=sflag, size = 0x4, scoped, tag = 'scoped memory for tpu_custom_call.1']
    #allocation14 [shape = 'u8[32768]{0}', space=vmem, size = 0x8000, scoped, tag = 'output window, operand 0, single buffered']
    %16 = vsyncpa [#allocation4], 0
    %17 = vsyncpa [#allocation7], 0
    %18 = vsyncpa [#allocation10], 0
    %19 = vsyncpa [#allocation13], 0
    %20 = vsyncpa [#allocation5], 0
    loop: start=0, step=1, limit=7
    $region2: #{tpu_custom_call.1} parent=1 // loop_pre_header
      _
    $region3: #{tpu_custom_call.1} parent=1 // loop_header
      %s22 = sphi 0, %s26
      %p23 = scmp.ge.s32.totalorder %s22, 7
      %s29 = sphi 0, %s41
      %s30 = sphi 0, %s37
      %s31 = sphi 0, %s29
      %s32 = sphi 0, %s30
      %s33 = sphi 0, %s31
      %s34 = sphi 0, %s32
      %s44 = sphi 0, %s46
      %s47 = sphi 0, %s44
      %s48 = sphi 0, %s47
      %s64 = sphi 0, %s48
      %s68 = sphi 0, %s68
      %s70 = sphi 0, %s68
      %s71 = sphi 0, %s70
      %s85 = sphi 0, %s71
      %s89 = sphi 0, %s89
      %s91 = sphi 0, %s89
      %s92 = sphi 0, %s91
      %s106 = sphi 0, %s92
      %s110 = sphi 0, %s110
      %s112 = sphi 0, %s110
      %s113 = sphi 0, %s112
      %s127 = sphi 0, %s113
      %s131 = sphi 0, %s131
      %s133 = sphi 0, %s131
      %s134 = sphi 0, %s133
      %s148 = sphi 0, %s134
      %s152 = sphi 0, %s152
      %s154 = sphi 0, %s152
      %s155 = sphi 0, %s154
      %s169 = sphi 0, %s155
      %s173 = sphi 0, %s173
      %s175 = sphi 0, %s173
      %s176 = sphi 0, %s175
      %s190 = sphi 0, %s176
      %s194 = sphi 0, %s194
      %s196 = sphi 0, %s194
      %s197 = sphi 0, %s196
      %s211 = sphi 0, %s197
      %s215 = sphi 0, %s215
      %s217 = sphi 0, %s215
      %s218 = sphi 0, %s217
      %s232 = sphi 0, %s218
      %s236 = sphi 0, %s236
      %s238 = sphi 0, %s236
      %s239 = sphi 0, %s238
      %s253 = sphi 0, %s239
      %s257 = sphi 0, %s257
      %s259 = sphi 0, %s257
      %s260 = sphi 0, %s259
      %s274 = sphi 0, %s260
      %s280 = sphi 0, %s282
      %s283 = sphi 0, %s280
      %s284 = sphi 0, %s283
      %s300 = sphi 0, %s284
    $region4: #{tpu_custom_call.1} parent=1 // loop_header_branch
      %25 = sbr.rel (%p23) target = $region8
    $region5: #{tpu_custom_call.1} parent=1 // loop_body
      %s27 = ssub.s32 %s22, 1
      %s28 = ssub.s32 %s22, 2
      %s35 = sadd.s32 1, %s30
      %p36 = scmp.ge.s32.totalorder %s35, 5
      %s37 = scalar_select %p36, 0, %s35
      %s38 = sadd.s32 1, %s29
      %s39 = scalar_select %p36, %s38, %s29
      %p40 = scmp.ge.s32.totalorder %s39, 1
      %s41 = scalar_select %p40, 0, %s39
      %s42 = ssub.s32 %s29, %s41
      %p43 = scmp.eq.s32.totalorder %s42, 0
      %s45 = sadd.s32 %s44, 1
      %s46 = scalar_select %p43, %s44, %s45
      %p49 = pneg %p43
      %p50 = scmp.eq.s32.totalorder %s22, 4
      %p51 = por %p49, %p50
      %p52 = scmp.ne.s32.totalorder %s44, %s47
      %p53 = scmp.eq.s32.totalorder %s22, 0
      %p54 = por %p52, %p53
      %p55 = scmp.ne.s32.totalorder %s44, %s47
      %p56 = scmp.eq.s32.totalorder %s27, 4
      %p57 = por %p55, %p56
      %p58 = scmp.ne.s32.totalorder %s47, %s48
      %p59 = scmp.eq.s32.totalorder %s27, 0
      %p60 = por %p58, %p59
      %p61 = scmp.ne.s32.totalorder %s47, %s48
      %p62 = scmp.eq.s32.totalorder %s28, 4
      %p63 = por %p61, %p62
      %p65 = scmp.ne.s32.totalorder %s48, %s64
      %p66 = scmp.eq.s32.totalorder %s28, 0
      %p67 = por %p65, %p66
      %s69 = sadd.s32 %s68, 1
      %p72 = scmp.eq.s32.totalorder %s22, 4
      %p73 = scmp.ne.s32.totalorder %s68, %s70
      %p74 = scmp.eq.s32.totalorder %s22, 0
      %p75 = por %p73, %p74
      %p76 = scmp.ne.s32.totalorder %s68, %s70
      %p77 = scmp.eq.s32.totalorder %s27, 4
      %p78 = por %p76, %p77
      %p79 = scmp.ne.s32.totalorder %s70, %s71
      %p80 = scmp.eq.s32.totalorder %s27, 0
      %p81 = por %p79, %p80
      %p82 = scmp.ne.s32.totalorder %s70, %s71
      %p83 = scmp.eq.s32.totalorder %s28, 4
      %p84 = por %p82, %p83
      %p86 = scmp.ne.s32.totalorder %s71, %s85
      %p87 = scmp.eq.s32.totalorder %s28, 0
      %p88 = por %p86, %p87
      %s90 = sadd.s32 %s89, 1
      %p93 = scmp.eq.s32.totalorder %s22, 4
      %p94 = scmp.ne.s32.totalorder %s89, %s91
      %p95 = scmp.eq.s32.totalorder %s22, 0
      %p96 = por %p94, %p95
      %p97 = scmp.ne.s32.totalorder %s89, %s91
      %p98 = scmp.eq.s32.totalorder %s27, 4
      %p99 = por %p97, %p98
      %p100 = scmp.ne.s32.totalorder %s91, %s92
      %p101 = scmp.eq.s32.totalorder %s27, 0
      %p102 = por %p100, %p101
      %p103 = scmp.ne.s32.totalorder %s91, %s92
      %p104 = scmp.eq.s32.totalorder %s28, 4
      %p105 = por %p103, %p104
      %p107 = scmp.ne.s32.totalorder %s92, %s106
      %p108 = scmp.eq.s32.totalorder %s28, 0
      %p109 = por %p107, %p108
      %s111 = sadd.s32 %s110, 1
      %p114 = scmp.eq.s32.totalorder %s22, 4
      %p115 = scmp.ne.s32.totalorder %s110, %s112
      %p116 = scmp.eq.s32.totalorder %s22, 0
      %p117 = por %p115, %p116
      %p118 = scmp.ne.s32.totalorder %s110, %s112
      %p119 = scmp.eq.s32.totalorder %s27, 4
      %p120 = por %p118, %p119
      %p121 = scmp.ne.s32.totalorder %s112, %s113
      %p122 = scmp.eq.s32.totalorder %s27, 0
      %p123 = por %p121, %p122
      %p124 = scmp.ne.s32.totalorder %s112, %s113
      %p125 = scmp.eq.s32.totalorder %s28, 4
      %p126 = por %p124, %p125
      %p128 = scmp.ne.s32.totalorder %s113, %s127
      %p129 = scmp.eq.s32.totalorder %s28, 0
      %p130 = por %p128, %p129
      %s132 = sadd.s32 %s131, 1
      %p135 = scmp.eq.s32.totalorder %s22, 4
      %p136 = scmp.ne.s32.totalorder %s131, %s133
      %p137 = scmp.eq.s32.totalorder %s22, 0
      %p138 = por %p136, %p137
      %p139 = scmp.ne.s32.totalorder %s131, %s133
      %p140 = scmp.eq.s32.totalorder %s27, 4
      %p141 = por %p139, %p140
      %p142 = scmp.ne.s32.totalorder %s133, %s134
      %p143 = scmp.eq.s32.totalorder %s27, 0
      %p144 = por %p142, %p143
      %p145 = scmp.ne.s32.totalorder %s133, %s134
      %p146 = scmp.eq.s32.totalorder %s28, 4
      %p147 = por %p145, %p146
      %p149 = scmp.ne.s32.totalorder %s134, %s148
      %p150 = scmp.eq.s32.totalorder %s28, 0
      %p151 = por %p149, %p150
      %s153 = sadd.s32 %s152, 1
      %p156 = scmp.eq.s32.totalorder %s22, 4
      %p157 = scmp.ne.s32.totalorder %s152, %s154
      %p158 = scmp.eq.s32.totalorder %s22, 0
      %p159 = por %p157, %p158
      %p160 = scmp.ne.s32.totalorder %s152, %s154
      %p161 = scmp.eq.s32.totalorder %s27, 4
      %p162 = por %p160, %p161
      %p163 = scmp.ne.s32.totalorder %s154, %s155
      %p164 = scmp.eq.s32.totalorder %s27, 0
      %p165 = por %p163, %p164
      %p166 = scmp.ne.s32.totalorder %s154, %s155
      %p167 = scmp.eq.s32.totalorder %s28, 4
      %p168 = por %p166, %p167
      %p170 = scmp.ne.s32.totalorder %s155, %s169
      %p171 = scmp.eq.s32.totalorder %s28, 0
      %p172 = por %p170, %p171
      %s174 = sadd.s32 %s173, 1
      %p177 = scmp.eq.s32.totalorder %s22, 4
      %p178 = scmp.ne.s32.totalorder %s173, %s175
      %p179 = scmp.eq.s32.totalorder %s22, 0
      %p180 = por %p178, %p179
      %p181 = scmp.ne.s32.totalorder %s173, %s175
      %p182 = scmp.eq.s32.totalorder %s27, 4
      %p183 = por %p181, %p182
      %p184 = scmp.ne.s32.totalorder %s175, %s176
      %p185 = scmp.eq.s32.totalorder %s27, 0
      %p186 = por %p184, %p185
      %p187 = scmp.ne.s32.totalorder %s175, %s176
      %p188 = scmp.eq.s32.totalorder %s28, 4
      %p189 = por %p187, %p188
      %p191 = scmp.ne.s32.totalorder %s176, %s190
      %p192 = scmp.eq.s32.totalorder %s28, 0
      %p193 = por %p191, %p192
      %s195 = sadd.s32 %s194, 1
      %p198 = scmp.eq.s32.totalorder %s22, 4
      %p199 = scmp.ne.s32.totalorder %s194, %s196
      %p200 = scmp.eq.s32.totalorder %s22, 0
      %p201 = por %p199, %p200
      %p202 = scmp.ne.s32.totalorder %s194, %s196
      %p203 = scmp.eq.s32.totalorder %s27, 4
      %p204 = por %p202, %p203
      %p205 = scmp.ne.s32.totalorder %s196, %s197
      %p206 = scmp.eq.s32.totalorder %s27, 0
      %p207 = por %p205, %p206
      %p208 = scmp.ne.s32.totalorder %s196, %s197
      %p209 = scmp.eq.s32.totalorder %s28, 4
      %p210 = por %p208, %p209
      %p212 = scmp.ne.s32.totalorder %s197, %s211
      %p213 = scmp.eq.s32.totalorder %s28, 0
      %p214 = por %p212, %p213
      %s216 = sadd.s32 %s215, 1
      %p219 = scmp.eq.s32.totalorder %s22, 4
      %p220 = scmp.ne.s32.totalorder %s215, %s217
      %p221 = scmp.eq.s32.totalorder %s22, 0
      %p222 = por %p220, %p221
      %p223 = scmp.ne.s32.totalorder %s215, %s217
      %p224 = scmp.eq.s32.totalorder %s27, 4
      %p225 = por %p223, %p224
      %p226 = scmp.ne.s32.totalorder %s217, %s218
      %p227 = scmp.eq.s32.totalorder %s27, 0
      %p228 = por %p226, %p227
      %p229 = scmp.ne.s32.totalorder %s217, %s218
      %p230 = scmp.eq.s32.totalorder %s28, 4
      %p231 = por %p229, %p230
      %p233 = scmp.ne.s32.totalorder %s218, %s232
      %p234 = scmp.eq.s32.totalorder %s28, 0
      %p235 = por %p233, %p234
      %s237 = sadd.s32 %s236, 1
      %p240 = scmp.eq.s32.totalorder %s22, 4
      %p241 = scmp.ne.s32.totalorder %s236, %s238
      %p242 = scmp.eq.s32.totalorder %s22, 0
      %p243 = por %p241, %p242
      %p244 = scmp.ne.s32.totalorder %s236, %s238
      %p245 = scmp.eq.s32.totalorder %s27, 4
      %p246 = por %p244, %p245
      %p247 = scmp.ne.s32.totalorder %s238, %s239
      %p248 = scmp.eq.s32.totalorder %s27, 0
      %p249 = por %p247, %p248
      %p250 = scmp.ne.s32.totalorder %s238, %s239
      %p251 = scmp.eq.s32.totalorder %s28, 4
      %p252 = por %p250, %p251
      %p254 = scmp.ne.s32.totalorder %s239, %s253
      %p255 = scmp.eq.s32.totalorder %s28, 0
      %p256 = por %p254, %p255
      %s258 = sadd.s32 %s257, 1
      %p261 = scmp.eq.s32.totalorder %s22, 4
      %p262 = scmp.ne.s32.totalorder %s257, %s259
      %p263 = scmp.eq.s32.totalorder %s22, 0
      %p264 = por %p262, %p263
      %p265 = scmp.ne.s32.totalorder %s257, %s259
      %p266 = scmp.eq.s32.totalorder %s27, 4
      %p267 = por %p265, %p266
      %p268 = scmp.ne.s32.totalorder %s259, %s260
      %p269 = scmp.eq.s32.totalorder %s27, 0
      %p270 = por %p268, %p269
      %p271 = scmp.ne.s32.totalorder %s259, %s260
      %p272 = scmp.eq.s32.totalorder %s28, 4
      %p273 = por %p271, %p272
      %p275 = scmp.ne.s32.totalorder %s260, %s274
      %p276 = scmp.eq.s32.totalorder %s28, 0
      %p277 = por %p275, %p276
      %s278 = ssub.s32 %s29, %s41
      %p279 = scmp.eq.s32.totalorder %s278, 0
      %s281 = sadd.s32 %s280, 1
      %s282 = scalar_select %p279, %s280, %s281
      %p285 = pneg %p279
      %p286 = scmp.eq.s32.totalorder %s22, 4
      %p287 = por %p285, %p286
      %p288 = scmp.ne.s32.totalorder %s280, %s283
      %p289 = scmp.eq.s32.totalorder %s22, 0
      %p290 = por %p288, %p289
      %p291 = scmp.ne.s32.totalorder %s280, %s283
      %p292 = scmp.eq.s32.totalorder %s27, 4
      %p293 = por %p291, %p292
      %p294 = scmp.ne.s32.totalorder %s283, %s284
      %p295 = scmp.eq.s32.totalorder %s27, 0
      %p296 = por %p294, %p295
      %p297 = scmp.ne.s32.totalorder %s283, %s284
      %p298 = scmp.eq.s32.totalorder %s28, 4
      %p299 = por %p297, %p298
      %p301 = scmp.ne.s32.totalorder %s284, %s300
      %p302 = scmp.eq.s32.totalorder %s28, 0
      %p303 = por %p301, %p302
      %p304 = scmp.le.s32.totalorder 1, %s22
      %p305 = scmp.lt.s32.totalorder %s22, 6
      %p306 = pnand %p304, %p305
      %p307 = pneg %p306
      // Predicated region
      $region9: #{tpu_custom_call.1} parent=5 // pred_check
        _
      $region10: #{tpu_custom_call.1} parent=5 // pred_check_branch
        %309 = sbr.rel (%p306) target = $region12
      $region11: #{tpu_custom_call.1} parent=5 // pred_region
        %s310 = ssub.s32 %s22, 1
        // Predicated region
        $region13: #{tpu_custom_call.1} parent=11 // pred_check
          %p311 = pneg %p60
        $region14: #{tpu_custom_call.1} parent=11 // pred_check_branch
          %313 = sbr.rel (%p311) target = $region16
        $region15: #{tpu_custom_call.1} parent=11 // pred_region
          %s314 = smul.u32 8, %s31
          %s316 = ssub.s32 2048, 2048
          %317 = vsyncadd [#allocation4], %s316
          %s318 = smul.addr %s314, 2
          %s319 = smul.addr %s318, 128
          %s320 = scalar_lea.hbm %s0, %s319
          %s321 = sshll.u32 [#allocation3], 4
          %s322 = int_to_ptr.vmem [resolvable:$true] %s321
          %327 = dma.hbm_to_vmem [thread:$0]  %s320, 2048, %s322, [#allocation4], 256, 256, 16
        $region16: #{tpu_custom_call.1} parent=11 // pred_fallthru
          _
        // Predicated region
        $region17: #{tpu_custom_call.1} parent=11 // pred_check
          %p328 = pneg %p81
        $region18: #{tpu_custom_call.1} parent=11 // pred_check_branch
          %330 = sbr.rel (%p328) target = $region20
        $region19: #{tpu_custom_call.1} parent=11 // pred_region
          %s332 = ssub.s32 4096, 4096
          %333 = vsyncadd [#allocation7], %s332
          %s334 = sshll.u32 [#allocation6], 4
          %s335 = int_to_ptr.vmem [resolvable:$true] %s334
          %340 = dma.hbm_to_vmem [thread:$0]  %s1, 4096, %s335, [#allocation7], 128, 128, 8
        $region20: #{tpu_custom_call.1} parent=11 // pred_fallthru
          _
        // Predicated region
        $region21: #{tpu_custom_call.1} parent=11 // pred_check
          %p341 = pneg %p102
        $region22: #{tpu_custom_call.1} parent=11 // pred_check_branch
          %343 = sbr.rel (%p341) target = $region24
        $region23: #{tpu_custom_call.1} parent=11 // pred_region
          %s345 = ssub.s32 16, 16
          %346 = vsyncadd [#allocation7], %s345
          %s348 = sshll.u32 [#allocation8], 4
          %s349 = int_to_ptr.vmem [resolvable:$true] %s348
          %351 = dma.hbm_to_vmem [thread:$0]  %s2, 16, %s349, [#allocation7]
        $region24: #{tpu_custom_call.1} parent=11 // pred_fallthru
          _
        // Predicated region
        $region25: #{tpu_custom_call.1} parent=11 // pred_check
          %p352 = pneg %p123
        $region26: #{tpu_custom_call.1} parent=11 // pred_check_branch
          %354 = sbr.rel (%p352) target = $region28
        $region27: #{tpu_custom_call.1} parent=11 // pred_region
          _
        $region28: #{tpu_custom_call.1} parent=11 // pred_fallthru
          _
        // Predicated region
        $region29: #{tpu_custom_call.1} parent=11 // pred_check
          %p355 = pneg %p144
        $region30: #{tpu_custom_call.1} parent=11 // pred_check_branch
          %357 = sbr.rel (%p355) target = $region32
        $region31: #{tpu_custom_call.1} parent=11 // pred_region
          _
        $region32: #{tpu_custom_call.1} parent=11 // pred_fallthru
          _
        // Predicated region
        $region33: #{tpu_custom_call.1} parent=11 // pred_check
          %p358 = pneg %p165
        $region34: #{tpu_custom_call.1} parent=11 // pred_check_branch
          %360 = sbr.rel (%p358) target = $region36
        $region35: #{tpu_custom_call.1} parent=11 // pred_region
          %s362 = ssub.s32 12288, 12288
          %363 = vsyncadd [#allocation10], %s362
          %s364 = sshll.u32 [#allocation9], 4
          %s365 = int_to_ptr.vmem [resolvable:$true] %s364
          %370 = dma.hbm_to_vmem [thread:$0]  %s5, 12288, %s365, [#allocation10], 256, 256, 16
        $region36: #{tpu_custom_call.1} parent=11 // pred_fallthru
          _
        // Predicated region
        $region37: #{tpu_custom_call.1} parent=11 // pred_check
          %p371 = pneg %p186
        $region38: #{tpu_custom_call.1} parent=11 // pred_check_branch
          %373 = sbr.rel (%p371) target = $region40
        $region39: #{tpu_custom_call.1} parent=11 // pred_region
          _
        $region40: #{tpu_custom_call.1} parent=11 // pred_fallthru
          _
        // Predicated region
        $region41: #{tpu_custom_call.1} parent=11 // pred_check
          %p374 = pneg %p207
        $region42: #{tpu_custom_call.1} parent=11 // pred_check_branch
          %376 = sbr.rel (%p374) target = $region44
        $region43: #{tpu_custom_call.1} parent=11 // pred_region
          %s378 = ssub.s32 12288, 12288
          %379 = vsyncadd [#allocation10], %s378
          %s380 = sshll.u32 [#allocation11], 4
          %s381 = int_to_ptr.vmem [resolvable:$true] %s380
          %386 = dma.hbm_to_vmem [thread:$0]  %s7, 12288, %s381, [#allocation10], 128, 128, 8
        $region44: #{tpu_custom_call.1} parent=11 // pred_fallthru
          _
        // Predicated region
        $region45: #{tpu_custom_call.1} parent=11 // pred_check
          %p387 = pneg %p228
        $region46: #{tpu_custom_call.1} parent=11 // pred_check_branch
          %389 = sbr.rel (%p387) target = $region48
        $region47: #{tpu_custom_call.1} parent=11 // pred_region
          _
        $region48: #{tpu_custom_call.1} parent=11 // pred_fallthru
          _
        // Predicated region
        $region49: #{tpu_custom_call.1} parent=11 // pred_check
          %p390 = pneg %p249
        $region50: #{tpu_custom_call.1} parent=11 // pred_check_branch
          %392 = sbr.rel (%p390) target = $region52
        $region51: #{tpu_custom_call.1} parent=11 // pred_region
          %s394 = ssub.s32 2048, 2048
          %395 = vsyncadd [#allocation13], %s394
          %s396 = sshll.u32 [#allocation12], 4
          %s397 = int_to_ptr.vmem [resolvable:$true] %s396
          %402 = dma.hbm_to_vmem [thread:$0]  %s9, 2048, %s397, [#allocation13], 128, 128, 8
        $region52: #{tpu_custom_call.1} parent=11 // pred_fallthru
          _
        // Predicated region
        $region53: #{tpu_custom_call.1} parent=11 // pred_check
          %p403 = pneg %p270
        $region54: #{tpu_custom_call.1} parent=11 // pred_check_branch
          %405 = sbr.rel (%p403) target = $region56
        $region55: #{tpu_custom_call.1} parent=11 // pred_region
          _
        $region56: #{tpu_custom_call.1} parent=11 // pred_fallthru
          _
      $region12: #{tpu_custom_call.1} parent=5 // pred_fallthru
        _
      %p406 = scmp.lt.s32.totalorder %s22, 5
      // Predicated region
      $region57: #{tpu_custom_call.1} parent=5 // pred_check
        %p407 = pneg %p406
      $region58: #{tpu_custom_call.1} parent=5 // pred_check_branch
        %409 = sbr.rel (%p407) target = $region60
      $region59: #{tpu_custom_call.1} parent=5 // pred_region
        _
      $region60: #{tpu_custom_call.1} parent=5 // pred_fallthru
        _
      %p410 = scmp.le.s32.totalorder 1, %s22
      %p411 = scmp.lt.s32.totalorder %s22, 6
      %p412 = pnand %p410, %p411
      %p413 = pneg %p412
      // Predicated region
      $region61: #{tpu_custom_call.1} parent=5 // pred_check
        _
      $region62: #{tpu_custom_call.1} parent=5 // pred_check_branch
        %415 = sbr.rel (%p412) target = $region64
      $region63: #{tpu_custom_call.1} parent=5 // pred_region
        %s416 = ssub.s32 %s22, 1
        // Predicated region
        $region65: #{tpu_custom_call.1} parent=63 // pred_check
          %p417 = pneg %p60
        $region66: #{tpu_custom_call.1} parent=63 // pred_check_branch
          %419 = sbr.rel (%p417) target = $region68
        $region67: #{tpu_custom_call.1} parent=63 // pred_region
          %420 = dma.done [#allocation4], 2048
        $region68: #{tpu_custom_call.1} parent=63 // pred_fallthru
          _
        // Predicated region
        $region69: #{tpu_custom_call.1} parent=63 // pred_check
          %p421 = pneg %p81
        $region70: #{tpu_custom_call.1} parent=63 // pred_check_branch
          %423 = sbr.rel (%p421) target = $region72
        $region71: #{tpu_custom_call.1} parent=63 // pred_region
          %424 = dma.done [#allocation7], 4096
        $region72: #{tpu_custom_call.1} parent=63 // pred_fallthru
          _
        // Predicated region
        $region73: #{tpu_custom_call.1} parent=63 // pred_check
          %p425 = pneg %p102
        $region74: #{tpu_custom_call.1} parent=63 // pred_check_branch
          %427 = sbr.rel (%p425) target = $region76
        $region75: #{tpu_custom_call.1} parent=63 // pred_region
          %428 = dma.done [#allocation7], 16
        $region76: #{tpu_custom_call.1} parent=63 // pred_fallthru
          _
        // Predicated region
        $region77: #{tpu_custom_call.1} parent=63 // pred_check
          %p429 = pneg %p165
        $region78: #{tpu_custom_call.1} parent=63 // pred_check_branch
          %431 = sbr.rel (%p429) target = $region80
        $region79: #{tpu_custom_call.1} parent=63 // pred_region
          %432 = dma.done [#allocation10], 12288
        $region80: #{tpu_custom_call.1} parent=63 // pred_fallthru
          _
        // Predicated region
        $region81: #{tpu_custom_call.1} parent=63 // pred_check
          %p433 = pneg %p207
        $region82: #{tpu_custom_call.1} parent=63 // pred_check_branch
          %435 = sbr.rel (%p433) target = $region84
        $region83: #{tpu_custom_call.1} parent=63 // pred_region
          %436 = dma.done [#allocation10], 12288
        $region84: #{tpu_custom_call.1} parent=63 // pred_fallthru
          _
        // Predicated region
        $region85: #{tpu_custom_call.1} parent=63 // pred_check
          %p437 = pneg %p249
        $region86: #{tpu_custom_call.1} parent=63 // pred_check_branch
          %439 = sbr.rel (%p437) target = $region88
        $region87: #{tpu_custom_call.1} parent=63 // pred_region
          %440 = dma.done [#allocation13], 2048
        $region88: #{tpu_custom_call.1} parent=63 // pred_fallthru
          _
        %p441 = pneg %p60
        %p442 = pneg %p57
        %p443 = pneg %p81
        %p444 = pneg %p78
        %p445 = pneg %p102
        %p446 = pneg %p99
        %p447 = pneg %p123
        %p448 = pneg %p120
        %p449 = pneg %p144
        %p450 = pneg %p141
        %p451 = pneg %p165
        %p452 = pneg %p162
        %p453 = pneg %p186
        %p454 = pneg %p183
        %p455 = pneg %p207
        %p456 = pneg %p204
        %p457 = pneg %p228
        %p458 = pneg %p225
        %p459 = pneg %p249
        %p460 = pneg %p246
        %p461 = pneg %p270
        %p462 = pneg %p267
        %p463 = pneg %p296
        %p464 = pneg %p293
        %s465 = smul.u32 8, %s31
        %s466 = smul.u32 8, %s31
        %p467 = scmp.eq.s32.totalorder %s32, 0
        // Predicated region
        $region89: #{tpu_custom_call.1} parent=63 // pred_check
          %p468 = pneg %p467
        $region90: #{tpu_custom_call.1} parent=63 // pred_check_branch
          %470 = sbr.rel (%p468) target = $region92
        $region91: #{tpu_custom_call.1} parent=63 // pred_region
          %v471 = vld [vmem:[#allocation3] sm:$0xff]
          %v472 = vld [vmem:[#allocation3 + $0x8] sm:$0xff]
          %v473 = vld [vmem:[#allocation3 + $0x10] sm:$0xff]
          %v474 = vld [vmem:[#allocation3 + $0x18] sm:$0xff]
          %v475 = vld [vmem:[#allocation3 + $0x20] sm:$0xff]
          %v476 = vld [vmem:[#allocation3 + $0x28] sm:$0xff]
          %v477 = vld [vmem:[#allocation3 + $0x30] sm:$0xff]
          %v478 = vld [vmem:[#allocation3 + $0x38] sm:$0xff]
          %v479 = vld [vmem:[#allocation3 + $0x40] sm:$0xff]
          %v480 = vld [vmem:[#allocation3 + $0x48] sm:$0xff]
          %v481 = vld [vmem:[#allocation3 + $0x50] sm:$0xff]
          %v482 = vld [vmem:[#allocation3 + $0x58] sm:$0xff]
          %v483 = vld [vmem:[#allocation3 + $0x60] sm:$0xff]
          %v484 = vld [vmem:[#allocation3 + $0x68] sm:$0xff]
          %v485 = vld [vmem:[#allocation3 + $0x70] sm:$0xff]
          %v486 = vld [vmem:[#allocation3 + $0x78] sm:$0xff]
          %v487 = vld [vmem:[#allocation6] sm:$0xff]
          %v488 = vld [vmem:[#allocation6 + $0x8] sm:$0xff]
          %v489 = vld [vmem:[#allocation6 + $0x10] sm:$0xff]
          %v490 = vld [vmem:[#allocation6 + $0x18] sm:$0xff]
          %v491 = vld [vmem:[#allocation6 + $0x20] sm:$0xff]
          %v492 = vld [vmem:[#allocation6 + $0x28] sm:$0xff]
          %v493 = vld [vmem:[#allocation6 + $0x30] sm:$0xff]
          %v494 = vld [vmem:[#allocation6 + $0x38] sm:$0xff]
          %v495 = vld [vmem:[#allocation6 + $0x40] sm:$0xff]
          %v496 = vld [vmem:[#allocation6 + $0x48] sm:$0xff]
          %v497 = vld [vmem:[#allocation6 + $0x50] sm:$0xff]
          %v498 = vld [vmem:[#allocation6 + $0x58] sm:$0xff]
          %v499 = vld [vmem:[#allocation6 + $0x60] sm:$0xff]
          %v500 = vld [vmem:[#allocation6 + $0x68] sm:$0xff]
          %v501 = vld [vmem:[#allocation6 + $0x70] sm:$0xff]
          %v502 = vld [vmem:[#allocation6 + $0x78] sm:$0xff]
          %v503 = vld [vmem:[#allocation6 + $0x80] sm:$0xff]
          %v504 = vld [vmem:[#allocation6 + $0x88] sm:$0xff]
          %v505 = vld [vmem:[#allocation6 + $0x90] sm:$0xff]
          %v506 = vld [vmem:[#allocation6 + $0x98] sm:$0xff]
          %v507 = vld [vmem:[#allocation6 + $0xa0] sm:$0xff]
          %v508 = vld [vmem:[#allocation6 + $0xa8] sm:$0xff]
          %v509 = vld [vmem:[#allocation6 + $0xb0] sm:$0xff]
          %v510 = vld [vmem:[#allocation6 + $0xb8] sm:$0xff]
          %v511 = vld [vmem:[#allocation6 + $0xc0] sm:$0xff]
          %v512 = vld [vmem:[#allocation6 + $0xc8] sm:$0xff]
          %v513 = vld [vmem:[#allocation6 + $0xd0] sm:$0xff]
          %v514 = vld [vmem:[#allocation6 + $0xd8] sm:$0xff]
          %v515 = vld [vmem:[#allocation6 + $0xe0] sm:$0xff]
          %v516 = vld [vmem:[#allocation6 + $0xe8] sm:$0xff]
          %v517 = vld [vmem:[#allocation6 + $0xf0] sm:$0xff]
          %v518 = vld [vmem:[#allocation6 + $0xf8] sm:$0xff]
          %v519 = vld [vmem:[#allocation8] sm:$0x1]
          %v521 = vlaneseq
          %v522 = vshrl.u32 %v521, 7
          %v523 = vsub.s32 0, %v522
          %v524 = vrot.slane %v519, %v523
          %526 = vmatprep.subr.mxu0 0.0
          %527 = vmatpush1.msra.mxu0 %v487
          %528 = vmatprep.subr.mxu0 0.0
          %529 = vmatpush1.msra.mxu0 %v488
          %530 = vmatprep.subr.mxu0 0.0
          %531 = vmatpush1.msra.mxu0 %v489
          %532 = vmatprep.subr.mxu0 0.0
          %533 = vmatpush1.msra.mxu0 %v490
          %534 = vmatprep.subr.mxu0 0.0
          %535 = vmatpush1.msra.mxu0 %v491
          %536 = vmatprep.subr.mxu0 0.0
          %537 = vmatpush1.msra.mxu0 %v492
          %538 = vmatprep.subr.mxu0 0.0
          %539 = vmatpush1.msra.mxu0 %v493
          %540 = vmatprep.subr.mxu0 0.0
          %541 = vmatpush1.msra.mxu0 %v494
          %542 = vmatprep.subr.mxu0 0.0
          %543 = vmatpush1.msra.mxu0 %v495
          %544 = vmatprep.subr.mxu0 0.0
          %545 = vmatpush1.msra.mxu0 %v496
          %546 = vmatprep.subr.mxu0 0.0
          %547 = vmatpush1.msra.mxu0 %v497
          %548 = vmatprep.subr.mxu0 0.0
          %549 = vmatpush1.msra.mxu0 %v498
          %550 = vmatprep.subr.mxu0 0.0
          %551 = vmatpush1.msra.mxu0 %v499
          %552 = vmatprep.subr.mxu0 0.0
          %553 = vmatpush1.msra.mxu0 %v500
          %554 = vmatprep.subr.mxu0 0.0
          %555 = vmatpush1.msra.mxu0 %v501
          %556 = vmatprep.subr.mxu0 0.0
          %557 = vmatpush1.msra.mxu0 %v502
          %558 = vmatprep.subr.mxu0 0.0
          %559 = vmatpush1.msra.mxu0 %v503
          %560 = vmatprep.subr.mxu0 0.0
          %561 = vmatpush1.msra.mxu0 %v504
          %562 = vmatprep.subr.mxu0 0.0
          %563 = vmatpush1.msra.mxu0 %v505
          %564 = vmatprep.subr.mxu0 0.0
          %565 = vmatpush1.msra.mxu0 %v506
          %566 = vmatprep.subr.mxu0 0.0
          %567 = vmatpush1.msra.mxu0 %v507
          %568 = vmatprep.subr.mxu0 0.0
          %569 = vmatpush1.msra.mxu0 %v508
          %570 = vmatprep.subr.mxu0 0.0
          %571 = vmatpush1.msra.mxu0 %v509
          %572 = vmatprep.subr.mxu0 0.0
          %573 = vmatpush1.msra.mxu0 %v510
          %574 = vmatprep.subr.mxu0 0.0
          %575 = vmatpush1.msra.mxu0 %v511
          %576 = vmatprep.subr.mxu0 0.0
          %577 = vmatpush1.msra.mxu0 %v512
          %578 = vmatprep.subr.mxu0 0.0
          %579 = vmatpush1.msra.mxu0 %v513
          %580 = vmatprep.subr.mxu0 0.0
          %581 = vmatpush1.msra.mxu0 %v514
          %582 = vmatprep.subr.mxu0 0.0
          %583 = vmatpush1.msra.mxu0 %v515
          %584 = vmatprep.subr.mxu0 0.0
          %585 = vmatpush1.msra.mxu0 %v516
          %586 = vmatprep.subr.mxu0 0.0
          %587 = vmatpush1.msra.mxu0 %v517
          %588 = vmatprep.subr.mxu0 0.0
          %589 = vmatpush1.msra.mxu0 %v518
          %590 = vmatprep.mubr.f32.mxu0 %v472
          %591 = vmatmul.mubr.f32.gmra.mrb[0].mxu0 %v471
          %v592 = vpop.f32.mrb[0].mxu0
          %v593 = vadd.f32 %v524, %v592
          %v594 = vpop.f32.mrb[0].mxu0
          %595 = vmatprep.mubr.f32.mxu0 %v474
          %596 = vmatmul.mubr.f32.gmra.mrb[0].mxu0 %v473
          %v597 = vpop.f32.mrb[0].mxu0
          %v598 = vadd.f32 %v524, %v597
          %v599 = vpop.f32.mrb[0].mxu0
          %600 = vmatprep.mubr.f32.mxu0 %v476
          %601 = vmatmul.mubr.f32.gmra.mrb[0].mxu0 %v475
          %v602 = vpop.f32.mrb[0].mxu0
          %v603 = vadd.f32 %v524, %v602
          %v604 = vpop.f32.mrb[0].mxu0
          %605 = vmatprep.mubr.f32.mxu0 %v478
          %606 = vmatmul.mubr.f32.gmra.mrb[0].mxu0 %v477
          %v607 = vpop.f32.mrb[0].mxu0
          %v608 = vadd.f32 %v524, %v607
          %v609 = vpop.f32.mrb[0].mxu0
          %610 = vmatprep.mubr.f32.mxu0 %v480
          %611 = vmatmul.mubr.f32.gmra.mrb[0].mxu0 %v479
          %v612 = vpop.f32.mrb[0].mxu0
          %v613 = vadd.f32 %v524, %v612
          %v614 = vpop.f32.mrb[0].mxu0
          %615 = vmatprep.mubr.f32.mxu0 %v482
          %616 = vmatmul.mubr.f32.gmra.mrb[0].mxu0 %v481
          %v617 = vpop.f32.mrb[0].mxu0
          %v618 = vadd.f32 %v524, %v617
          %v619 = vpop.f32.mrb[0].mxu0
          %620 = vmatprep.mubr.f32.mxu0 %v484
          %621 = vmatmul.mubr.f32.gmra.mrb[0].mxu0 %v483
          %v622 = vpop.f32.mrb[0].mxu0
          %v623 = vadd.f32 %v524, %v622
          %v624 = vpop.f32.mrb[0].mxu0
          %625 = vmatprep.mubr.f32.mxu0 %v486
          %626 = vmatmul.mubr.f32.gmra.mrb[0].mxu0 %v485
          %v627 = vpop.f32.mrb[0].mxu0
          %v628 = vadd.f32 %v524, %v627
          %v629 = vpop.f32.mrb[0].mxu0
          %630 = vdwg.mxu0
          %631 = vst [vmem:[#allocation2] sm:$0xff] %v593
          %632 = vst [vmem:[#allocation2 + $0x8] sm:$0xff] %v598
          %633 = vst [vmem:[#allocation2 + $0x10] sm:$0xff] %v603
          %634 = vst [vmem:[#allocation2 + $0x18] sm:$0xff] %v608
          %635 = vst [vmem:[#allocation2 + $0x20] sm:$0xff] %v613
          %636 = vst [vmem:[#allocation2 + $0x28] sm:$0xff] %v618
          %637 = vst [vmem:[#allocation2 + $0x30] sm:$0xff] %v623
          %638 = vst [vmem:[#allocation2 + $0x38] sm:$0xff] %v628
        $region92: #{tpu_custom_call.1} parent=63 // pred_fallthru
          _
        %p639 = scmp.gt.s32.totalorder %s32, 0
        %p640 = scmp.le.s32.totalorder %s32, 3
        %p641 = pnand %p639, %p640
        %p642 = pneg %p641
        // Predicated region
        $region93: #{tpu_custom_call.1} parent=63 // pred_check
          _
        $region94: #{tpu_custom_call.1} parent=63 // pred_check_branch
          %644 = sbr.rel (%p641) target = $region96
        $region95: #{tpu_custom_call.1} parent=63 // pred_region
          %s645 = ssub.s32 %s32, 1
          %p646 = scmp.gt.s32.totalorder %s645, 0
          %s647 = scalar_select %p646, %s645, 0
          %p648 = scmp.lt.s32.totalorder %s647, 2
          %s649 = scalar_select %p648, %s647, 2
          %v650 = vld [vmem:[#allocation2] sm:$0xff]
          %v651 = vld [vmem:[#allocation2 + $0x8] sm:$0xff]
          %v652 = vld [vmem:[#allocation2 + $0x10] sm:$0xff]
          %v653 = vld [vmem:[#allocation2 + $0x18] sm:$0xff]
          %v654 = vld [vmem:[#allocation2 + $0x20] sm:$0xff]
          %v655 = vld [vmem:[#allocation2 + $0x28] sm:$0xff]
          %v656 = vld [vmem:[#allocation2 + $0x30] sm:$0xff]
          %v657 = vld [vmem:[#allocation2 + $0x38] sm:$0xff]
          %s658 = scalar_lea.vmem %s3, %s649
          %v659 = vld [vmem:[%s658] sm:$0x1]
          %s660 = scalar_lea.vmem %s4, %s649
          %v661 = vld [vmem:[%s660] sm:$0x1]
          %662 = vadd.xlane.f32.xlu0 %v650
          %v663 = vpop.xlane.xlu0 %662
          %664 = vadd.xlane.f32.xlu0 %v651
          %v665 = vpop.xlane.xlu0 %664
          %666 = vadd.xlane.f32.xlu0 %v652
          %v667 = vpop.xlane.xlu0 %666
          %668 = vadd.xlane.f32.xlu0 %v653
          %v669 = vpop.xlane.xlu0 %668
          %670 = vadd.xlane.f32.xlu0 %v654
          %v671 = vpop.xlane.xlu0 %670
          %672 = vadd.xlane.f32.xlu0 %v655
          %v673 = vpop.xlane.xlu0 %672
          %674 = vadd.xlane.f32.xlu0 %v656
          %v675 = vpop.xlane.xlu0 %674
          %676 = vadd.xlane.f32.xlu0 %v657
          %v677 = vpop.xlane.xlu0 %676
          %v678 = vrcp.pop 128.0
          %v679 = vmul.f32 %v663, %v678
          %v680 = vmul.f32 %v665, %v678
          %v681 = vmul.f32 %v667, %v678
          %v682 = vmul.f32 %v669, %v678
          %v683 = vmul.f32 %v671, %v678
          %v684 = vmul.f32 %v673, %v678
          %v685 = vmul.f32 %v675, %v678
          %v686 = vmul.f32 %v677, %v678
          %v687 = vmul.f32 %v650, %v650
          %v688 = vmul.f32 %v651, %v651
          %v689 = vmul.f32 %v652, %v652
          %v690 = vmul.f32 %v653, %v653
          %v691 = vmul.f32 %v654, %v654
          %v692 = vmul.f32 %v655, %v655
          %v693 = vmul.f32 %v656, %v656
          %v694 = vmul.f32 %v657, %v657
          %695 = vadd.xlane.f32.xlu0 %v687
          %v696 = vpop.xlane.xlu0 %695
          %697 = vadd.xlane.f32.xlu0 %v688
          %v698 = vpop.xlane.xlu0 %697
          %699 = vadd.xlane.f32.xlu0 %v689
          %v700 = vpop.xlane.xlu0 %699
          %701 = vadd.xlane.f32.xlu0 %v690
          %v702 = vpop.xlane.xlu0 %701
          %703 = vadd.xlane.f32.xlu0 %v691
          %v704 = vpop.xlane.xlu0 %703
          %705 = vadd.xlane.f32.xlu0 %v692
          %v706 = vpop.xlane.xlu0 %705
          %707 = vadd.xlane.f32.xlu0 %v693
          %v708 = vpop.xlane.xlu0 %707
          %709 = vadd.xlane.f32.xlu0 %v694
          %v710 = vpop.xlane.xlu0 %709
          %v711 = vmul.f32 %v696, %v678
          %v712 = vmul.f32 %v698, %v678
          %v713 = vmul.f32 %v700, %v678
          %v714 = vmul.f32 %v702, %v678
          %v715 = vmul.f32 %v704, %v678
          %v716 = vmul.f32 %v706, %v678
          %v717 = vmul.f32 %v708, %v678
          %v718 = vmul.f32 %v710, %v678
          %v719 = vmul.f32 %v679, %v679
          %v720 = vmul.f32 %v680, %v680
          %v721 = vmul.f32 %v681, %v681
          %v722 = vmul.f32 %v682, %v682
          %v723 = vmul.f32 %v683, %v683
          %v724 = vmul.f32 %v684, %v684
          %v725 = vmul.f32 %v685, %v685
          %v726 = vmul.f32 %v686, %v686
          %v727 = vsub.f32 %v711, %v719
          %v728 = vsub.f32 %v712, %v720
          %v729 = vsub.f32 %v713, %v721
          %v730 = vsub.f32 %v714, %v722
          %v731 = vsub.f32 %v715, %v723
          %v732 = vsub.f32 %v716, %v724
          %v733 = vsub.f32 %v717, %v725
          %v734 = vsub.f32 %v718, %v726
          %v735 = vsub.f32 %v650, %v679
          %v736 = vsub.f32 %v651, %v680
          %v737 = vsub.f32 %v652, %v681
          %v738 = vsub.f32 %v653, %v682
          %v739 = vsub.f32 %v654, %v683
          %v740 = vsub.f32 %v655, %v684
          %v741 = vsub.f32 %v656, %v685
          %v742 = vsub.f32 %v657, %v686
          %v743 = vadd.f32 %v727, 1e-05
          %v744 = vadd.f32 %v728, 1e-05
          %v745 = vadd.f32 %v729, 1e-05
          %v746 = vadd.f32 %v730, 1e-05
          %v747 = vadd.f32 %v731, 1e-05
          %v748 = vadd.f32 %v732, 1e-05
          %v749 = vadd.f32 %v733, 1e-05
          %v750 = vadd.f32 %v734, 1e-05
          %v751 = vrsqrt.pop %v743
          %v752 = vrsqrt.pop %v744
          %v753 = vrsqrt.pop %v745
          %v754 = vrsqrt.pop %v746
          %v755 = vrsqrt.pop %v747
          %v756 = vrsqrt.pop %v748
          %v757 = vrsqrt.pop %v749
          %v758 = vrsqrt.pop %v750
          %v759 = vmul.f32 %v735, %v751
          %v760 = vmul.f32 %v736, %v752
          %v761 = vmul.f32 %v737, %v753
          %v762 = vmul.f32 %v738, %v754
          %v763 = vmul.f32 %v739, %v755
          %v764 = vmul.f32 %v740, %v756
          %v765 = vmul.f32 %v741, %v757
          %v766 = vmul.f32 %v742, %v758
          %v768 = vlaneseq
          %v769 = vshrl.u32 %v768, 7
          %v770 = vsub.s32 0, %v769
          %v771 = vrot.slane %v659, %v770
          %v773 = vmul.f32 %v759, %v771
          %v774 = vmul.f32 %v760, %v771
          %v775 = vmul.f32 %v761, %v771
          %v776 = vmul.f32 %v762, %v771
          %v777 = vmul.f32 %v763, %v771
          %v778 = vmul.f32 %v764, %v771
          %v779 = vmul.f32 %v765, %v771
          %v780 = vmul.f32 %v766, %v771
          %v782 = vlaneseq
          %v783 = vshrl.u32 %v782, 7
          %v784 = vsub.s32 0, %v783
          %v785 = vrot.slane %v661, %v784
          %v787 = vadd.f32 %v773, %v785
          %v788 = vadd.f32 %v774, %v785
          %v789 = vadd.f32 %v775, %v785
          %v790 = vadd.f32 %v776, %v785
          %v791 = vadd.f32 %v777, %v785
          %v792 = vadd.f32 %v778, %v785
          %v793 = vadd.f32 %v779, %v785
          %v794 = vadd.f32 %v780, %v785
          %s795 = smul.u32 %s649, 2
          %s796 = scalar_lea.vmem %s6, %s795
          %v797 = vld [vmem:[%s796] sm:$0x3]
          %s798 = scalar_lea.vmem %s8, %s649
          %v799 = vld [vmem:[%s798] sm:$0x1]
          %v801 = vlaneseq
          %v802 = vshrl.u32 %v801, 7
          %v803 = vsub.s32 0, %v802
          %v804 = vrot.slane %v799, %v803
          %v806 = vadd.f32 %v650, %v804
          %v807 = vadd.f32 %v651, %v804
          %v808 = vadd.f32 %v652, %v804
          %v809 = vadd.f32 %v653, %v804
          %v810 = vadd.f32 %v654, %v804
          %v811 = vadd.f32 %v655, %v804
          %v812 = vadd.f32 %v656, %v804
          %v813 = vadd.f32 %v657, %v804
          %s814 = smul.u32 %s649, 32
          %s815 = smul.addr %s814, 8
          %s816 = scalar_lea.vmem [#allocation9], %s815
          %v817 = vld [vmem:[%s816] sm:$0xff]
          %v818 = vld [vmem:[%s816 + $0x8] sm:$0xff]
          %v819 = vld [vmem:[%s816 + $0x10] sm:$0xff]
          %v820 = vld [vmem:[%s816 + $0x18] sm:$0xff]
          %v821 = vld [vmem:[%s816 + $0x20] sm:$0xff]
          %v822 = vld [vmem:[%s816 + $0x28] sm:$0xff]
          %v823 = vld [vmem:[%s816 + $0x30] sm:$0xff]
          %v824 = vld [vmem:[%s816 + $0x38] sm:$0xff]
          %v825 = vld [vmem:[%s816 + $0x40] sm:$0xff]
          %v826 = vld [vmem:[%s816 + $0x48] sm:$0xff]
          %v827 = vld [vmem:[%s816 + $0x50] sm:$0xff]
          %v828 = vld [vmem:[%s816 + $0x58] sm:$0xff]
          %v829 = vld [vmem:[%s816 + $0x60] sm:$0xff]
          %v830 = vld [vmem:[%s816 + $0x68] sm:$0xff]
          %v831 = vld [vmem:[%s816 + $0x70] sm:$0xff]
          %v832 = vld [vmem:[%s816 + $0x78] sm:$0xff]
          %v833 = vld [vmem:[%s816 + $0x80] sm:$0xff]
          %v834 = vld [vmem:[%s816 + $0x88] sm:$0xff]
          %v835 = vld [vmem:[%s816 + $0x90] sm:$0xff]
          %v836 = vld [vmem:[%s816 + $0x98] sm:$0xff]
          %v837 = vld [vmem:[%s816 + $0xa0] sm:$0xff]
          %v838 = vld [vmem:[%s816 + $0xa8] sm:$0xff]
          %v839 = vld [vmem:[%s816 + $0xb0] sm:$0xff]
          %v840 = vld [vmem:[%s816 + $0xb8] sm:$0xff]
          %v841 = vld [vmem:[%s816 + $0xc0] sm:$0xff]
          %v842 = vld [vmem:[%s816 + $0xc8] sm:$0xff]
          %v843 = vld [vmem:[%s816 + $0xd0] sm:$0xff]
          %v844 = vld [vmem:[%s816 + $0xd8] sm:$0xff]
          %v845 = vld [vmem:[%s816 + $0xe0] sm:$0xff]
          %v846 = vld [vmem:[%s816 + $0xe8] sm:$0xff]
          %v847 = vld [vmem:[%s816 + $0xf0] sm:$0xff]
          %v848 = vld [vmem:[%s816 + $0xf8] sm:$0xff]
          %v850 = vlaneseq
          %v851 = vshrl.u32 %v850, 7
          %v852 = vsub.s32 0, %v851
          %v853 = vrot.slane %v797, %v852
          %v854 = vlaneseq
          %v855 = vshrl.u32 %v854, 7
          %v856 = vsub.s32 1, %v855
          %v857 = vrot.slane %v797, %v856
          %860 = vmatprep.subr.mxu0 %v818
          %861 = vmatpush1.msra.mxu0 %v817
          %862 = vmatprep.subr.mxu0 %v820
          %863 = vmatpush1.msra.mxu0 %v819
          %864 = vmatprep.subr.mxu0 %v822
          %865 = vmatpush1.msra.mxu0 %v821
          %866 = vmatprep.subr.mxu0 %v824
          %867 = vmatpush1.msra.mxu0 %v823
          %868 = vmatprep.subr.mxu0 %v826
          %869 = vmatpush1.msra.mxu0 %v825
          %870 = vmatprep.subr.mxu0 %v828
          %871 = vmatpush1.msra.mxu0 %v827
          %872 = vmatprep.subr.mxu0 %v830
          %873 = vmatpush1.msra.mxu0 %v829
          %874 = vmatprep.subr.mxu0 %v832
          %875 = vmatpush1.msra.mxu0 %v831
          %876 = vmatprep.subr.mxu0 %v834
          %877 = vmatpush1.msra.mxu0 %v833
          %878 = vmatprep.subr.mxu0 %v836
          %879 = vmatpush1.msra.mxu0 %v835
          %880 = vmatprep.subr.mxu0 %v838
          %881 = vmatpush1.msra.mxu0 %v837
          %882 = vmatprep.subr.mxu0 %v840
          %883 = vmatpush1.msra.mxu0 %v839
          %884 = vmatprep.subr.mxu0 %v842
          %885 = vmatpush1.msra.mxu0 %v841
          %886 = vmatprep.subr.mxu0 %v844
          %887 = vmatpush1.msra.mxu0 %v843
          %888 = vmatprep.subr.mxu0 %v846
          %889 = vmatpush1.msra.mxu0 %v845
          %890 = vmatprep.subr.mxu0 %v848
          %891 = vmatpush1.msra.mxu0 %v847
          %892 = vmatprep.subr.mxu0 0.0
          %893 = vmatpush1.msra.mxu0 0.0
          %894 = vmatprep.subr.mxu0 0.0
          %895 = vmatpush1.msra.mxu0 0.0
          %896 = vmatprep.subr.mxu0 0.0
          %897 = vmatpush1.msra.mxu0 0.0
          %898 = vmatprep.subr.mxu0 0.0
          %899 = vmatpush1.msra.mxu0 0.0
          %900 = vmatprep.subr.mxu0 0.0
          %901 = vmatpush1.msra.mxu0 0.0
          %902 = vmatprep.subr.mxu0 0.0
          %903 = vmatpush1.msra.mxu0 0.0
          %904 = vmatprep.subr.mxu0 0.0
          %905 = vmatpush1.msra.mxu0 0.0
          %906 = vmatprep.subr.mxu0 0.0
          %907 = vmatpush1.msra.mxu0 0.0
          %908 = vmatprep.subr.mxu0 0.0
          %909 = vmatpush1.msra.mxu0 0.0
          %910 = vmatprep.subr.mxu0 0.0
          %911 = vmatpush1.msra.mxu0 0.0
          %912 = vmatprep.subr.mxu0 0.0
          %913 = vmatpush1.msra.mxu0 0.0
          %914 = vmatprep.subr.mxu0 0.0
          %915 = vmatpush1.msra.mxu0 0.0
          %916 = vmatprep.subr.mxu0 0.0
          %917 = vmatpush1.msra.mxu0 0.0
          %918 = vmatprep.subr.mxu0 0.0
          %919 = vmatpush1.msra.mxu0 0.0
          %920 = vmatprep.subr.mxu0 0.0
          %921 = vmatpush1.msra.mxu0 0.0
          %922 = vmatprep.subr.mxu0 0.0
          %923 = vmatpush1.msra.mxu0 0.0
          %924 = vmatprep.mubr.f32.mxu0 0.0
          %925 = vmatmul.mubr.f32.gmra.mrb[0].mxu0 %v787
          %v926 = vpop.f32.mrb[0].mxu0
          %v927 = vadd.f32 %v853, %v926
          %v928 = vpop.f32.mrb[0].mxu0
          %v929 = vadd.f32 %v857, %v928
          %930 = vmatprep.mubr.f32.mxu0 0.0
          %931 = vmatmul.mubr.f32.gmra.mrb[0].mxu0 %v788
          %v932 = vpop.f32.mrb[0].mxu0
          %v933 = vadd.f32 %v853, %v932
          %v934 = vpop.f32.mrb[0].mxu0
          %v935 = vadd.f32 %v857, %v934
          %936 = vmatprep.mubr.f32.mxu0 0.0
          %937 = vmatmul.mubr.f32.gmra.mrb[0].mxu0 %v789
          %v938 = vpop.f32.mrb[0].mxu0
          %v939 = vadd.f32 %v853, %v938
          %v940 = vpop.f32.mrb[0].mxu0
          %v941 = vadd.f32 %v857, %v940
          %942 = vmatprep.mubr.f32.mxu0 0.0
          %943 = vmatmul.mubr.f32.gmra.mrb[0].mxu0 %v790
          %v944 = vpop.f32.mrb[0].mxu0
          %v945 = vadd.f32 %v853, %v944
          %v946 = vpop.f32.mrb[0].mxu0
          %v947 = vadd.f32 %v857, %v946
          %948 = vmatprep.mubr.f32.mxu0 0.0
          %949 = vmatmul.mubr.f32.gmra.mrb[0].mxu0 %v791
          %v950 = vpop.f32.mrb[0].mxu0
          %v951 = vadd.f32 %v853, %v950
          %v952 = vpop.f32.mrb[0].mxu0
          %v953 = vadd.f32 %v857, %v952
          %954 = vmatprep.mubr.f32.mxu0 0.0
          %955 = vmatmul.mubr.f32.gmra.mrb[0].mxu0 %v792
          %v956 = vpop.f32.mrb[0].mxu0
          %v957 = vadd.f32 %v853, %v956
          %v958 = vpop.f32.mrb[0].mxu0
          %v959 = vadd.f32 %v857, %v958
          %960 = vmatprep.mubr.f32.mxu0 0.0
          %961 = vmatmul.mubr.f32.gmra.mrb[0].mxu0 %v793
          %v962 = vpop.f32.mrb[0].mxu0
          %v963 = vadd.f32 %v853, %v962
          %v964 = vpop.f32.mrb[0].mxu0
          %v965 = vadd.f32 %v857, %v964
          %966 = vmatprep.mubr.f32.mxu0 0.0
          %967 = vmatmul.mubr.f32.gmra.mrb[0].mxu0 %v794
          %v968 = vpop.f32.mrb[0].mxu0
          %v969 = vadd.f32 %v853, %v968
          %v970 = vpop.f32.mrb[0].mxu0
          %v971 = vadd.f32 %v857, %v970
          %972 = vdwg.mxu0
          %v973 = vmax.f32 %v927, 0.0
          %v974 = vmax.f32 %v929, 0.0
          %v975 = vmax.f32 %v933, 0.0
          %v976 = vmax.f32 %v935, 0.0
          %v977 = vmax.f32 %v939, 0.0
          %v978 = vmax.f32 %v941, 0.0
          %v979 = vmax.f32 %v945, 0.0
          %v980 = vmax.f32 %v947, 0.0
          %v981 = vmax.f32 %v951, 0.0
          %v982 = vmax.f32 %v953, 0.0
          %v983 = vmax.f32 %v957, 0.0
          %v984 = vmax.f32 %v959, 0.0
          %v985 = vmax.f32 %v963, 0.0
          %v986 = vmax.f32 %v965, 0.0
          %v987 = vmax.f32 %v969, 0.0
          %v988 = vmax.f32 %v971, 0.0
          %s989 = smul.u32 %s649, 256
          %s990 = scalar_lea.vmem [#allocation11], %s989
          %v991 = vld [vmem:[%s990] sm:$0xff]
          %v992 = vld [vmem:[%s990 + $0x8] sm:$0xff]
          %v993 = vld [vmem:[%s990 + $0x10] sm:$0xff]
          %v994 = vld [vmem:[%s990 + $0x18] sm:$0xff]
          %v995 = vld [vmem:[%s990 + $0x20] sm:$0xff]
          %v996 = vld [vmem:[%s990 + $0x28] sm:$0xff]
          %v997 = vld [vmem:[%s990 + $0x30] sm:$0xff]
          %v998 = vld [vmem:[%s990 + $0x38] sm:$0xff]
          %v999 = vld [vmem:[%s990 + $0x40] sm:$0xff]
          %v1000 = vld [vmem:[%s990 + $0x48] sm:$0xff]
          %v1001 = vld [vmem:[%s990 + $0x50] sm:$0xff]
          %v1002 = vld [vmem:[%s990 + $0x58] sm:$0xff]
          %v1003 = vld [vmem:[%s990 + $0x60] sm:$0xff]
          %v1004 = vld [vmem:[%s990 + $0x68] sm:$0xff]
          %v1005 = vld [vmem:[%s990 + $0x70] sm:$0xff]
          %v1006 = vld [vmem:[%s990 + $0x78] sm:$0xff]
          %v1007 = vld [vmem:[%s990 + $0x80] sm:$0xff]
          %v1008 = vld [vmem:[%s990 + $0x88] sm:$0xff]
          %v1009 = vld [vmem:[%s990 + $0x90] sm:$0xff]
          %v1010 = vld [vmem:[%s990 + $0x98] sm:$0xff]
          %v1011 = vld [vmem:[%s990 + $0xa0] sm:$0xff]
          %v1012 = vld [vmem:[%s990 + $0xa8] sm:$0xff]
          %v1013 = vld [vmem:[%s990 + $0xb0] sm:$0xff]
          %v1014 = vld [vmem:[%s990 + $0xb8] sm:$0xff]
          %v1015 = vld [vmem:[%s990 + $0xc0] sm:$0xff]
          %v1016 = vld [vmem:[%s990 + $0xc8] sm:$0xff]
          %v1017 = vld [vmem:[%s990 + $0xd0] sm:$0xff]
          %v1018 = vld [vmem:[%s990 + $0xd8] sm:$0xff]
          %v1019 = vld [vmem:[%s990 + $0xe0] sm:$0xff]
          %v1020 = vld [vmem:[%s990 + $0xe8] sm:$0xff]
          %v1021 = vld [vmem:[%s990 + $0xf0] sm:$0xff]
          %v1022 = vld [vmem:[%s990 + $0xf8] sm:$0xff]
          %1023 = vmatprep.subr.mxu0 0.0
          %1024 = vmatpush1.msra.mxu0 %v991
          %1025 = vmatprep.subr.mxu0 0.0
          %1026 = vmatpush1.msra.mxu0 %v992
          %1027 = vmatprep.subr.mxu0 0.0
          %1028 = vmatpush1.msra.mxu0 %v993
          %1029 = vmatprep.subr.mxu0 0.0
          %1030 = vmatpush1.msra.mxu0 %v994
          %1031 = vmatprep.subr.mxu0 0.0
          %1032 = vmatpush1.msra.mxu0 %v995
          %1033 = vmatprep.subr.mxu0 0.0
          %1034 = vmatpush1.msra.mxu0 %v996
          %1035 = vmatprep.subr.mxu0 0.0
          %1036 = vmatpush1.msra.mxu0 %v997
          %1037 = vmatprep.subr.mxu0 0.0
          %1038 = vmatpush1.msra.mxu0 %v998
          %1039 = vmatprep.subr.mxu0 0.0
          %1040 = vmatpush1.msra.mxu0 %v999
          %1041 = vmatprep.subr.mxu0 0.0
          %1042 = vmatpush1.msra.mxu0 %v1000
          %1043 = vmatprep.subr.mxu0 0.0
          %1044 = vmatpush1.msra.mxu0 %v1001
          %1045 = vmatprep.subr.mxu0 0.0
          %1046 = vmatpush1.msra.mxu0 %v1002
          %1047 = vmatprep.subr.mxu0 0.0
          %1048 = vmatpush1.msra.mxu0 %v1003
          %1049 = vmatprep.subr.mxu0 0.0
          %1050 = vmatpush1.msra.mxu0 %v1004
          %1051 = vmatprep.subr.mxu0 0.0
          %1052 = vmatpush1.msra.mxu0 %v1005
          %1053 = vmatprep.subr.mxu0 0.0
          %1054 = vmatpush1.msra.mxu0 %v1006
          %1055 = vmatprep.subr.mxu0 0.0
          %1056 = vmatpush1.msra.mxu0 %v1007
          %1057 = vmatprep.subr.mxu0 0.0
          %1058 = vmatpush1.msra.mxu0 %v1008
          %1059 = vmatprep.subr.mxu0 0.0
          %1060 = vmatpush1.msra.mxu0 %v1009
          %1061 = vmatprep.subr.mxu0 0.0
          %1062 = vmatpush1.msra.mxu0 %v1010
          %1063 = vmatprep.subr.mxu0 0.0
          %1064 = vmatpush1.msra.mxu0 %v1011
          %1065 = vmatprep.subr.mxu0 0.0
          %1066 = vmatpush1.msra.mxu0 %v1012
          %1067 = vmatprep.subr.mxu0 0.0
          %1068 = vmatpush1.msra.mxu0 %v1013
          %1069 = vmatprep.subr.mxu0 0.0
          %1070 = vmatpush1.msra.mxu0 %v1014
          %1071 = vmatprep.subr.mxu0 0.0
          %1072 = vmatpush1.msra.mxu0 %v1015
          %1073 = vmatprep.subr.mxu0 0.0
          %1074 = vmatpush1.msra.mxu0 %v1016
          %1075 = vmatprep.subr.mxu0 0.0
          %1076 = vmatpush1.msra.mxu0 %v1017
          %1077 = vmatprep.subr.mxu0 0.0
          %1078 = vmatpush1.msra.mxu0 %v1018
          %1079 = vmatprep.subr.mxu0 0.0
          %1080 = vmatpush1.msra.mxu0 %v1019
          %1081 = vmatprep.subr.mxu0 0.0
          %1082 = vmatpush1.msra.mxu0 %v1020
          %1083 = vmatprep.subr.mxu0 0.0
          %1084 = vmatpush1.msra.mxu0 %v1021
          %1085 = vmatprep.subr.mxu0 0.0
          %1086 = vmatpush1.msra.mxu0 %v1022
          %1087 = vmatprep.mubr.f32.mxu0 %v974
          %1088 = vmatmul.mubr.f32.gmra.mrb[0].mxu0 %v973
          %v1089 = vpop.f32.mrb[0].mxu0
          %v1090 = vadd.f32 0.0, %v1089
          %v1091 = vpop.f32.mrb[0].mxu0
          %1092 = vmatprep.mubr.f32.mxu0 %v976
          %1093 = vmatmul.mubr.f32.gmra.mrb[0].mxu0 %v975
          %v1094 = vpop.f32.mrb[0].mxu0
          %v1095 = vadd.f32 0.0, %v1094
          %v1096 = vpop.f32.mrb[0].mxu0
          %1097 = vmatprep.mubr.f32.mxu0 %v978
          %1098 = vmatmul.mubr.f32.gmra.mrb[0].mxu0 %v977
          %v1099 = vpop.f32.mrb[0].mxu0
          %v1100 = vadd.f32 0.0, %v1099
          %v1101 = vpop.f32.mrb[0].mxu0
          %1102 = vmatprep.mubr.f32.mxu0 %v980
          %1103 = vmatmul.mubr.f32.gmra.mrb[0].mxu0 %v979
          %v1104 = vpop.f32.mrb[0].mxu0
          %v1105 = vadd.f32 0.0, %v1104
          %v1106 = vpop.f32.mrb[0].mxu0
          %1107 = vmatprep.mubr.f32.mxu0 %v982
          %1108 = vmatmul.mubr.f32.gmra.mrb[0].mxu0 %v981
          %v1109 = vpop.f32.mrb[0].mxu0
          %v1110 = vadd.f32 0.0, %v1109
          %v1111 = vpop.f32.mrb[0].mxu0
          %1112 = vmatprep.mubr.f32.mxu0 %v984
          %1113 = vmatmul.mubr.f32.gmra.mrb[0].mxu0 %v983
          %v1114 = vpop.f32.mrb[0].mxu0
          %v1115 = vadd.f32 0.0, %v1114
          %v1116 = vpop.f32.mrb[0].mxu0
          %1117 = vmatprep.mubr.f32.mxu0 %v986
          %1118 = vmatmul.mubr.f32.gmra.mrb[0].mxu0 %v985
          %v1119 = vpop.f32.mrb[0].mxu0
          %v1120 = vadd.f32 0.0, %v1119
          %v1121 = vpop.f32.mrb[0].mxu0
          %1122 = vmatprep.mubr.f32.mxu0 %v988
          %1123 = vmatmul.mubr.f32.gmra.mrb[0].mxu0 %v987
          %v1124 = vpop.f32.mrb[0].mxu0
          %v1125 = vadd.f32 0.0, %v1124
          %v1126 = vpop.f32.mrb[0].mxu0
          %1127 = vdwg.mxu0
          %v1128 = vadd.f32 %v806, %v1090
          %v1129 = vadd.f32 %v807, %v1095
          %v1130 = vadd.f32 %v808, %v1100
          %v1131 = vadd.f32 %v809, %v1105
          %v1132 = vadd.f32 %v810, %v1110
          %v1133 = vadd.f32 %v811, %v1115
          %v1134 = vadd.f32 %v812, %v1120
          %v1135 = vadd.f32 %v813, %v1125
          %1136 = vst [vmem:[#allocation2] sm:$0xff] %v1128
          %1137 = vst [vmem:[#allocation2 + $0x8] sm:$0xff] %v1129
          %1138 = vst [vmem:[#allocation2 + $0x10] sm:$0xff] %v1130
          %1139 = vst [vmem:[#allocation2 + $0x18] sm:$0xff] %v1131
          %1140 = vst [vmem:[#allocation2 + $0x20] sm:$0xff] %v1132
          %1141 = vst [vmem:[#allocation2 + $0x28] sm:$0xff] %v1133
          %1142 = vst [vmem:[#allocation2 + $0x30] sm:$0xff] %v1134
          %1143 = vst [vmem:[#allocation2 + $0x38] sm:$0xff] %v1135
        $region96: #{tpu_custom_call.1} parent=63 // pred_fallthru
          _
        %p1144 = scmp.eq.s32.totalorder %s32, 4
        // Predicated region
        $region97: #{tpu_custom_call.1} parent=63 // pred_check
          %p1145 = pneg %p1144
        $region98: #{tpu_custom_call.1} parent=63 // pred_check_branch
          %1147 = sbr.rel (%p1145) target = $region100
        $region99: #{tpu_custom_call.1} parent=63 // pred_region
          %v1148 = vld [vmem:[#allocation2] sm:$0xff]
          %v1149 = vld [vmem:[#allocation2 + $0x8] sm:$0xff]
          %v1150 = vld [vmem:[#allocation2 + $0x10] sm:$0xff]
          %v1151 = vld [vmem:[#allocation2 + $0x18] sm:$0xff]
          %v1152 = vld [vmem:[#allocation2 + $0x20] sm:$0xff]
          %v1153 = vld [vmem:[#allocation2 + $0x28] sm:$0xff]
          %v1154 = vld [vmem:[#allocation2 + $0x30] sm:$0xff]
          %v1155 = vld [vmem:[#allocation2 + $0x38] sm:$0xff]
          %v1156 = vld [vmem:[#allocation12] sm:$0xff]
          %v1157 = vld [vmem:[#allocation12 + $0x8] sm:$0xff]
          %v1158 = vld [vmem:[#allocation12 + $0x10] sm:$0xff]
          %v1159 = vld [vmem:[#allocation12 + $0x18] sm:$0xff]
          %v1160 = vld [vmem:[#allocation12 + $0x20] sm:$0xff]
          %v1161 = vld [vmem:[#allocation12 + $0x28] sm:$0xff]
          %v1162 = vld [vmem:[#allocation12 + $0x30] sm:$0xff]
          %v1163 = vld [vmem:[#allocation12 + $0x38] sm:$0xff]
          %v1164 = vld [vmem:[#allocation12 + $0x40] sm:$0xff]
          %v1165 = vld [vmem:[#allocation12 + $0x48] sm:$0xff]
          %v1166 = vld [vmem:[#allocation12 + $0x50] sm:$0xff]
          %v1167 = vld [vmem:[#allocation12 + $0x58] sm:$0xff]
          %v1168 = vld [vmem:[#allocation12 + $0x60] sm:$0xff]
          %v1169 = vld [vmem:[#allocation12 + $0x68] sm:$0xff]
          %v1170 = vld [vmem:[#allocation12 + $0x70] sm:$0xff]
          %v1171 = vld [vmem:[#allocation12 + $0x78] sm:$0xff]
          %v1172 = vld [vmem:[%s10] sm:$0x1]
          %v1174 = vlaneseq
          %v1175 = vshrl.u32 %v1174, 7
          %v1176 = vsub.s32 0, %v1175
          %v1177 = vrot.slane %v1172, %v1176
          %1179 = vmatprep.subr.mxu0 0.0
          %1180 = vmatpush1.msra.mxu0 %v1156
          %1181 = vmatprep.subr.mxu0 0.0
          %1182 = vmatpush1.msra.mxu0 %v1157
          %1183 = vmatprep.subr.mxu0 0.0
          %1184 = vmatpush1.msra.mxu0 %v1158
          %1185 = vmatprep.subr.mxu0 0.0
          %1186 = vmatpush1.msra.mxu0 %v1159
          %1187 = vmatprep.subr.mxu0 0.0
          %1188 = vmatpush1.msra.mxu0 %v1160
          %1189 = vmatprep.subr.mxu0 0.0
          %1190 = vmatpush1.msra.mxu0 %v1161
          %1191 = vmatprep.subr.mxu0 0.0
          %1192 = vmatpush1.msra.mxu0 %v1162
          %1193 = vmatprep.subr.mxu0 0.0
          %1194 = vmatpush1.msra.mxu0 %v1163
          %1195 = vmatprep.subr.mxu0 0.0
          %1196 = vmatpush1.msra.mxu0 %v1164
          %1197 = vmatprep.subr.mxu0 0.0
          %1198 = vmatpush1.msra.mxu0 %v1165
          %1199 = vmatprep.subr.mxu0 0.0
          %1200 = vmatpush1.msra.mxu0 %v1166
          %1201 = vmatprep.subr.mxu0 0.0
          %1202 = vmatpush1.msra.mxu0 %v1167
          %1203 = vmatprep.subr.mxu0 0.0
          %1204 = vmatpush1.msra.mxu0 %v1168
          %1205 = vmatprep.subr.mxu0 0.0
          %1206 = vmatpush1.msra.mxu0 %v1169
          %1207 = vmatprep.subr.mxu0 0.0
          %1208 = vmatpush1.msra.mxu0 %v1170
          %1209 = vmatprep.subr.mxu0 0.0
          %1210 = vmatpush1.msra.mxu0 %v1171
          %1211 = vmatprep.subr.mxu0 0.0
          %1212 = vmatpush1.msra.mxu0 0.0
          %1213 = vmatprep.subr.mxu0 0.0
          %1214 = vmatpush1.msra.mxu0 0.0
          %1215 = vmatprep.subr.mxu0 0.0
          %1216 = vmatpush1.msra.mxu0 0.0
          %1217 = vmatprep.subr.mxu0 0.0
          %1218 = vmatpush1.msra.mxu0 0.0
          %1219 = vmatprep.subr.mxu0 0.0
          %1220 = vmatpush1.msra.mxu0 0.0
          %1221 = vmatprep.subr.mxu0 0.0
          %1222 = vmatpush1.msra.mxu0 0.0
          %1223 = vmatprep.subr.mxu0 0.0
          %1224 = vmatpush1.msra.mxu0 0.0
          %1225 = vmatprep.subr.mxu0 0.0
          %1226 = vmatpush1.msra.mxu0 0.0
          %1227 = vmatprep.subr.mxu0 0.0
          %1228 = vmatpush1.msra.mxu0 0.0
          %1229 = vmatprep.subr.mxu0 0.0
          %1230 = vmatpush1.msra.mxu0 0.0
          %1231 = vmatprep.subr.mxu0 0.0
          %1232 = vmatpush1.msra.mxu0 0.0
          %1233 = vmatprep.subr.mxu0 0.0
          %1234 = vmatpush1.msra.mxu0 0.0
          %1235 = vmatprep.subr.mxu0 0.0
          %1236 = vmatpush1.msra.mxu0 0.0
          %1237 = vmatprep.subr.mxu0 0.0
          %1238 = vmatpush1.msra.mxu0 0.0
          %1239 = vmatprep.subr.mxu0 0.0
          %1240 = vmatpush1.msra.mxu0 0.0
          %1241 = vmatprep.subr.mxu0 0.0
          %1242 = vmatpush1.msra.mxu0 0.0
          %1243 = vmatprep.mubr.f32.mxu0 0.0
          %1244 = vmatmul.mubr.f32.gmra.mrb[0].mxu0 %v1148
          %v1245 = vpop.f32.mrb[0].mxu0
          %v1246 = vadd.f32 %v1177, %v1245
          %v1247 = vpop.f32.mrb[0].mxu0
          %1248 = vmatprep.mubr.f32.mxu0 0.0
          %1249 = vmatmul.mubr.f32.gmra.mrb[0].mxu0 %v1149
          %v1250 = vpop.f32.mrb[0].mxu0
          %v1251 = vadd.f32 %v1177, %v1250
          %v1252 = vpop.f32.mrb[0].mxu0
          %1253 = vmatprep.mubr.f32.mxu0 0.0
          %1254 = vmatmul.mubr.f32.gmra.mrb[0].mxu0 %v1150
          %v1255 = vpop.f32.mrb[0].mxu0
          %v1256 = vadd.f32 %v1177, %v1255
          %v1257 = vpop.f32.mrb[0].mxu0
          %1258 = vmatprep.mubr.f32.mxu0 0.0
          %1259 = vmatmul.mubr.f32.gmra.mrb[0].mxu0 %v1151
          %v1260 = vpop.f32.mrb[0].mxu0
          %v1261 = vadd.f32 %v1177, %v1260
          %v1262 = vpop.f32.mrb[0].mxu0
          %1263 = vmatprep.mubr.f32.mxu0 0.0
          %1264 = vmatmul.mubr.f32.gmra.mrb[0].mxu0 %v1152
          %v1265 = vpop.f32.mrb[0].mxu0
          %v1266 = vadd.f32 %v1177, %v1265
          %v1267 = vpop.f32.mrb[0].mxu0
          %1268 = vmatprep.mubr.f32.mxu0 0.0
          %1269 = vmatmul.mubr.f32.gmra.mrb[0].mxu0 %v1153
          %v1270 = vpop.f32.mrb[0].mxu0
          %v1271 = vadd.f32 %v1177, %v1270
          %v1272 = vpop.f32.mrb[0].mxu0
          %1273 = vmatprep.mubr.f32.mxu0 0.0
          %1274 = vmatmul.mubr.f32.gmra.mrb[0].mxu0 %v1154
          %v1275 = vpop.f32.mrb[0].mxu0
          %v1276 = vadd.f32 %v1177, %v1275
          %v1277 = vpop.f32.mrb[0].mxu0
          %1278 = vmatprep.mubr.f32.mxu0 0.0
          %1279 = vmatmul.mubr.f32.gmra.mrb[0].mxu0 %v1155
          %v1280 = vpop.f32.mrb[0].mxu0
          %v1281 = vadd.f32 %v1177, %v1280
          %v1282 = vpop.f32.mrb[0].mxu0
          %1283 = vdwg.mxu0
          %1284 = vst [vmem:[#allocation14] sm:$0xff] %v1246
          %1285 = vst [vmem:[#allocation14 + $0x8] sm:$0xff] %v1251
          %1286 = vst [vmem:[#allocation14 + $0x10] sm:$0xff] %v1256
          %1287 = vst [vmem:[#allocation14 + $0x18] sm:$0xff] %v1261
          %1288 = vst [vmem:[#allocation14 + $0x20] sm:$0xff] %v1266
          %1289 = vst [vmem:[#allocation14 + $0x28] sm:$0xff] %v1271
          %1290 = vst [vmem:[#allocation14 + $0x30] sm:$0xff] %v1276
          %1291 = vst [vmem:[#allocation14 + $0x38] sm:$0xff] %v1281
        $region100: #{tpu_custom_call.1} parent=63 // pred_fallthru
          _
        // Predicated region
        $region101: #{tpu_custom_call.1} parent=63 // pred_check
          %p1292 = pneg %p293
        $region102: #{tpu_custom_call.1} parent=63 // pred_check_branch
          %1294 = sbr.rel (%p1292) target = $region104
        $region103: #{tpu_custom_call.1} parent=63 // pred_region
          %s1295 = smul.u32 8, %s31
          %s1297 = ssub.s32 1024, 1024
          %1298 = vsyncadd [#allocation5], %s1297
          %s1299 = smul.addr %s1295, 128
          %s1300 = scalar_lea.hbm %s11, %s1299
          %s1301 = sshll.u32 [#allocation14], 4
          %s1302 = int_to_ptr.vmem [resolvable:$true] %s1301
          %1307 = dma.vmem_to_hbm [thread:$0]  %s1302, 1024, %s1300, [#allocation5], 128, 128, 8
        $region104: #{tpu_custom_call.1} parent=63 // pred_fallthru
          _
        // Predicated region
        $region105: #{tpu_custom_call.1} parent=63 // pred_check
          %p1308 = pneg %p293
        $region106: #{tpu_custom_call.1} parent=63 // pred_check_branch
          %1310 = sbr.rel (%p1308) target = $region108
        $region107: #{tpu_custom_call.1} parent=63 // pred_region
          %1311 = dma.done [#allocation5], 1024
        $region108: #{tpu_custom_call.1} parent=63 // pred_fallthru
          _
      $region64: #{tpu_custom_call.1} parent=5 // pred_fallthru
        _
      %p1312 = scmp.le.s32.totalorder 2, %s22
      // Predicated region
      $region109: #{tpu_custom_call.1} parent=5 // pred_check
        %p1313 = pneg %p1312
      $region110: #{tpu_custom_call.1} parent=5 // pred_check_branch
        %1315 = sbr.rel (%p1313) target = $region112
      $region111: #{tpu_custom_call.1} parent=5 // pred_region
        %s1316 = ssub.s32 %s22, 2
      $region112: #{tpu_custom_call.1} parent=5 // pred_fallthru
        _
    $region6: #{tpu_custom_call.1} parent=1 // loop_footer
      %s26 = sadd.s32 1, %s22
    $region7: #{tpu_custom_call.1} parent=1 // loop_footer_branch
      %21 = sbr.rel target = $region3
    $region8: #{tpu_custom_call.1} parent=1 // loop_exit
      _
    %1317 = vsyncpa [#allocation4], 1
    %s1318 = scalar_lea.sflag [#allocation4], 1
    %1319 = vsyncpa %s1318, 1
    %1320 = vsyncpa [#allocation7], 1
    %1321 = vsyncpa [#allocation10], 1
    %1322 = vsyncpa [#allocation13], 1
    %1323 = vsyncpa [#allocation5], 1
    %s1324 = scalar_lea.sflag [#allocation5], 1
    %1325 = vsyncpa %s1324, 1

</llo_original>
